<compile_context>
chip_gen: v7x
topology: tpu7x:2x2x1
jax: 0.10.0
libtpu: 0.0.40
codegen_flags: <defaults>
</compile_context>

<pallas_src>
import functools

import jax
import jax.numpy as jnp
from jax.experimental import pallas as pl
from jax.experimental.pallas import tpu as pltpu


def ggru_cell_kernel(g_ref, h_ref, mask_ref,
                     gW_ref, uT_ref, ub_ref,
                     hW_ref, hb_ref, VrT_ref,
                     out_ref):
    TB, L, H = h_ref.shape
    Hp = gW_ref.shape[1] // 3          # per-gate column stride (lane-padded)
    cd = uT_ref.dtype                  # MXU compute dtype (f32 or bf16)

    g = g_ref[...].astype(jnp.float32)           # (TB, H)
    mask = mask_ref[...].astype(jnp.float32)     # (TB, L, 1)

    # ---- fused g-side GEMM: one MXU pass for [w(g) | Wz(g) | Wr(g)] ----
    g_proj = jnp.dot(g.astype(cd), gW_ref[...],
                     preferred_element_type=jnp.float32)          # (TB, 3*Hp)
    # u-bias folded into the (TB,H) term instead of the (TB,L,H) uh add.
    wg = g_proj[:, 0 * Hp:0 * Hp + H] + ub_ref[...]
    Wzg = g_proj[:, 1 * Hp:1 * Hp + H]
    Wrg = g_proj[:, 2 * Hp:2 * Hp + H]

    # ---- u(h): the dominant GEMM, (TB*L, H) x (H, H) ----
    # h stays in its storage dtype; only the MXU operand is cast to cd.
    h_nat = h_ref[...]                                             # (TB, L, H)
    uh = jnp.dot(h_nat.reshape(TB * L, H).astype(cd), uT_ref[...],
                 preferred_element_type=jnp.float32).reshape(TB, L, H)

    # f = sigmoid(w(g) + u(h) + u_b) * mask   (mask before softmax, as in PyTorch)
    # f is in [0,1] -> exp never overflows, so no max-subtraction is needed, and
    # the reciprocal is factored out of the softmax weights.
    f = jax.nn.sigmoid(wg[:, None, :] + uh) * mask                 # (TB, L, H)
    e = jnp.exp(f)
    denom = jnp.sum(e, axis=1)                                     # (TB, H)
    num = jnp.sum(h_nat * e, axis=1)                               # (TB, H), f32
    h_avg = num * pl.reciprocal(denom, approx=False)               # (TB, H)

    # ---- fused h_avg-side GEMM: [Uz | Ur | Vh](h_avg) + [Ub_z | Ub_r | V_b] ----
    h_proj = jnp.dot(h_avg.astype(cd), hW_ref[...],
                     preferred_element_type=jnp.float32) + hb_ref[...]
    z = jax.nn.sigmoid(Wzg + h_proj[:, 0 * Hp:0 * Hp + H])
    r = jax.nn.sigmoid(Wrg + h_proj[:, 1 * Hp:1 * Hp + H])

    # gt = tanh(V(cat([r*g, h_avg], -1)))  — V split column-wise, no concat needed.
    gt = jnp.tanh(jnp.dot((r * g).astype(cd), VrT_ref[...],
                          preferred_element_type=jnp.float32)
                  + h_proj[:, 2 * Hp:2 * Hp + H])

    out_ref[...] = ((1.0 - z) * g + z * gt).astype(out_ref.dtype)


def make_params(key, hidden_size, lane_pad=128):
    """Deterministic nn.Linear-style init. Returns (kernel_params, raw_params)."""
    H = hidden_size
    Hp = ((H + lane_pad - 1) // lane_pad) * lane_pad
    ks = jax.random.split(key, 8)

    def unif(k, shape, fan_in):
        bound = 1.0 / jnp.sqrt(float(fan_in))
        return jax.random.uniform(k, shape, jnp.float32, -bound, bound)

    # nn.Linear weights are (out_features, in_features); biases (out_features,)
    raw = dict(
        w_weight=unif(ks[0], (H, H), H),            # w: Linear(H, H, bias=False)
        u_weight=unif(ks[1], (H, H), H),            # u: Linear(H, H)
        u_bias=unif(ks[2], (H,), H),
        W_weight=unif(ks[3], (2 * H, H), H),        # W: Linear(H, 2H, bias=False)
        U_weight=unif(ks[4], (2 * H, H), H),        # U: Linear(H, 2H)
        U_bias=unif(ks[5], (2 * H,), H),
        V_weight=unif(ks[6], (H, 2 * H), 2 * H),    # V: Linear(2H, H)
        V_bias=unif(ks[7], (H,), 2 * H),
    )

    def pad_cols(mat):   # (H, H) -> (H, Hp): zero-pad columns to lane boundary
        return jnp.pad(mat, ((0, 0), (0, Hp - H)))

    def pad_row(vec):    # (H,) -> (1, Hp)
        return jnp.pad(vec, (0, Hp - H))[None, :]

    # g-side fusion:     g @ [ w^T | Wz^T | Wr^T ]
    gW_T = jnp.concatenate([pad_cols(raw["w_weight"].T),
                            pad_cols(raw["W_weight"][:H].T),
                            pad_cols(raw["W_weight"][H:].T)], axis=1)     # (H, 3*Hp)
    # h_avg-side fusion: h_avg @ [ Uz^T | Ur^T | Vh^T ] + [Ub_z | Ub_r | V_b]
    hW_T = jnp.concatenate([pad_cols(raw["U_weight"][:H].T),
                            pad_cols(raw["U_weight"][H:].T),
                            pad_cols(raw["V_weight"][:, H:].T)], axis=1)  # (H, 3*Hp)
    h_b = jnp.concatenate([pad_row(raw["U_bias"][:H]),
                           pad_row(raw["U_bias"][H:]),
                           pad_row(raw["V_bias"])], axis=1)               # (1, 3*Hp)

    kernel_params = dict(
        gW_T=gW_T,
        u_T=raw["u_weight"].T, u_b=raw["u_bias"][None, :],
        hW_T=hW_T, h_b=h_b,
        Vr_T=raw["V_weight"][:, :H].T,
    )
    return kernel_params, raw


def _vmem_capacity_bytes():
    """Per-core VMEM (generation-aware); conservative fallback if query fails."""
    try:
        return int(pltpu.get_tpu_info().vmem_capacity_bytes)
    except Exception:
        return 64 << 20   # v7x per-TensorCore; v5e/v6e have 128 MiB


def _choose_batch_tile(B, L, H, h_itemsize, vmem_cap):
    """Largest multiple-of-8 divisor of B whose working set fits ~half of VMEM,
    preferring >= 2 grid steps so both v7x TensorCores get work."""
    per_row = (2 * L * H * h_itemsize        # double-buffered h block
               + 3 * L * H * 4               # uh / f / e intermediates (f32)
               + 2 * L * 128 * 4             # lane-padded mask block, 2 buffers
               + 8 * H * 4)                  # g / out / small (TB,H) temps
    cap = max((vmem_cap // 2) // max(per_row, 1), 1)
    best = None
    for tb in range(8, B, 8):                # multiples of 8, strictly < B
        if B % tb == 0 and tb <= cap:
            best = tb
    if best is None:
        # TODO(synk): pad B upstream to a multiple of 16 so awkward batch sizes
        # still keep both v7x TensorCores busy instead of collapsing to grid=(1,).
        best = B
    return best


def _vmem_limit_bytes(TB, L, H, Hp, w_itemsize, h_itemsize, vmem_cap):
    # weights/biases (default pipeline still allocates 2 buffers even though the
    # constant index_map means they are only DMA'd once)
    weights = (2 * H * 3 * Hp + 2 * H * H) * w_itemsize + (H + 3 * Hp) * 4
    # per-step pipeline blocks (h, lane-padded mask, g, out), double-buffered
    blocks = TB * L * H * h_itemsize + TB * L * 128 * 4 + 2 * TB * H * 4
    # in-kernel intermediates: uh / f / e over (TB,L,H) plus (TB,3*Hp) temps
    interm = 3 * TB * L * H * 4 + 8 * TB * 3 * Hp * 4
    est = 2 * weights + 2 * blocks + interm + (4 << 20)
    hi = max(vmem_cap - (8 << 20), 32 << 20)
    return int(min(max(est, 32 << 20), hi))


@functools.partial(jax.jit, static_argnames=("batch_tile", "matmul_dtype"))
def ggru_cell(g, h, mask, params, *, batch_tile=None, matmul_dtype=None):
    B, L, H = h.shape
    out_dtype = g.dtype
    Hp = params["gW_T"].shape[1] // 3
    vmem_cap = _vmem_capacity_bytes()
    h_isz = jnp.dtype(h.dtype).itemsize

    TB = None
    if (batch_tile is not None and B % int(batch_tile) == 0
            and (int(batch_tile) % 8 == 0 or int(batch_tile) == B)):
        TB = int(batch_tile)
    if TB is None:
        TB = _choose_batch_tile(B, L, H, h_isz, vmem_cap)
    grid = (B // TB,)

    # Reduced-precision MXU path: cast only the (small, one-time) weight
    # matrices in the wrapper; h / g / mask / biases stay in f32 HBM and the
    # kernel casts just the MXU lhs operands. No extra HBM pass over h.
    wdt = jnp.float32 if matmul_dtype is None else jnp.dtype(matmul_dtype)
    gW = params["gW_T"].astype(wdt)
    uT = params["u_T"].astype(wdt)
    hW = params["hW_T"].astype(wdt)
    VrT = params["Vr_T"].astype(wdt)
    ub = params["u_b"].astype(jnp.float32)
    hb = params["h_b"].astype(jnp.float32)
    mask3 = mask.astype(jnp.float32)[:, :, None]        # (B, L, 1)
    # TODO(synk): replace the (B,L,1) mask with scalar-prefetched per-row lengths
    # (SMEM + broadcasted_iota) and add an inner "arbitrary" L-tiling axis with
    # running sum(e)/sum(h*e) accumulators for very long L on v7x's 64 MiB VMEM;
    # single-buffering the constant weight specs (pl.Buffered(1)) would also halve
    # resident weight VMEM at large H.

    const2 = lambda i: (0, 0)
    in_specs = [
        pl.BlockSpec((TB, H), lambda i: (i, 0)),            # g
        pl.BlockSpec((TB, L, H), lambda i: (i, 0, 0)),      # h (dominant HBM traffic)
        pl.BlockSpec((TB, L, 1), lambda i: (i, 0, 0)),      # mask
        pl.BlockSpec((H, 3 * Hp), const2),                  # fused [w|Wz|Wr]^T
        pl.BlockSpec((H, H), const2),                       # u^T
        pl.BlockSpec((1, H), const2),                       # u bias
        pl.BlockSpec((H, 3 * Hp), const2),                  # fused [Uz|Ur|Vh]^T
        pl.BlockSpec((1, 3 * Hp), const2),                  # fused [Ub_z|Ub_r|V_b]
        pl.BlockSpec((H, H), const2),                       # Vr^T
    ]
    out_specs = pl.BlockSpec((TB, H), lambda i: (i, 0))

    return pl.pallas_call(
        ggru_cell_kernel,
        out_shape=jax.ShapeDtypeStruct((B, H), out_dtype),
        grid=grid,
        in_specs=in_specs,
        out_specs=out_specs,
        compiler_params=pltpu.CompilerParams(
            dimension_semantics=("parallel",),   # batch grid -> v7x's 2 TCs
            vmem_limit_bytes=_vmem_limit_bytes(TB, L, H, Hp,
                                               jnp.dtype(wdt).itemsize,
                                               h_isz, vmem_cap),
        ),
    )(g, h, mask3, gW, uT, ub, hW, hb, VrT)


def ggru_ref(g, h, mask, raw):
    """Pure-JAX reference matching the PyTorch forward exactly (raw weights)."""
    H = g.shape[-1]
    hp = jax.lax.Precision.HIGHEST
    f = jax.nn.sigmoid(jnp.matmul(g, raw["w_weight"].T, precision=hp)[:, None, :]
                       + jnp.matmul(h, raw["u_weight"].T, precision=hp)
                       + raw["u_bias"]) * mask.astype(jnp.float32)[:, :, None]
    f_w = jax.nn.softmax(f, axis=1)
    h_avg = jnp.sum(h * f_w, axis=1)
    zr = jax.nn.sigmoid(jnp.matmul(g, raw["W_weight"].T, precision=hp)
                        + jnp.matmul(h_avg, raw["U_weight"].T, precision=hp)
                        + raw["U_bias"])
    z, r = zr[:, :H], zr[:, H:]
    gt = jnp.tanh(jnp.matmul(jnp.concatenate([r * g, h_avg], -1),
                             raw["V_weight"].T, precision=hp) + raw["V_bias"])
    return (1.0 - z) * g + z * gt


if __name__ == "__main__":
    B, L, H = 16, 8, 32
    key = jax.random.PRNGKey(0)
    k_g, k_h, k_p = jax.random.split(key, 3)

    g = jax.random.normal(k_g, (B, H), jnp.float32)
    h = jax.random.normal(k_h, (B, L, H), jnp.float32)
    # valid-word mask over the word axis (varying lengths, at least 1 word)
    lengths = (jnp.arange(B, dtype=jnp.int32) % L) + 1
    mask = (jnp.arange(L)[None, :] < lengths[:, None]).astype(jnp.float32)

    params, raw = make_params(k_p, H)
    ref = ggru_ref(g, h, mask, raw)

    # f32 path, auto batch tile (TB=8 -> 2-step pipelined grid).
    out = ggru_cell(g, h, mask, params)
    jax.block_until_ready(out)
    assert out.shape == (B, H) and out.dtype == jnp.float32
    assert jnp.allclose(out, ref, atol=1e-3, rtol=1e-3), "f32 mismatch vs reference"

    # bf16-weight MXU path (v6e/v7x rate win; bandwidth/VMEM play on v5e).
    out_bf16 = ggru_cell(g, h, mask, params, matmul_dtype=jnp.bfloat16)
    jax.block_until_ready(out_bf16)
    assert jnp.allclose(out_bf16, ref, atol=5e-2, rtol=5e-2), "bf16 mismatch vs reference"

    print("KERNEL_OK")
</pallas_src>

<mosaic_0001>
module attributes {stable_mosaic.version = 11 : i64} {
  func.func @ggru_cell_kernel(%arg0: i32, %arg1: memref<8x32xf32, #tpu.memory_space<vmem>>, %arg2: memref<8x8x32xf32, #tpu.memory_space<vmem>>, %arg3: memref<8x8x1xf32, #tpu.memory_space<vmem>>, %arg4: memref<32x384xf32, #tpu.memory_space<vmem>>, %arg5: memref<32x32xf32, #tpu.memory_space<vmem>>, %arg6: memref<1x32xf32, #tpu.memory_space<vmem>>, %arg7: memref<32x384xf32, #tpu.memory_space<vmem>>, %arg8: memref<1x384xf32, #tpu.memory_space<vmem>>, %arg9: memref<32x32xf32, #tpu.memory_space<vmem>>, %arg10: memref<8x32xf32, #tpu.memory_space<vmem>>) attributes {dimension_semantics = [#tpu.dimension_semantics<parallel>], iteration_bounds = array<i64: 2>, scalar_prefetch = 0 : i64, scratch_operands = 0 : i64, tpu.core_type = #tpu.core_type<tc>, window_params = [{transform_indices = @transform_0, window_bounds = array<i64: 8, 32>}, {transform_indices = @transform_1, window_bounds = array<i64: 8, 8, 32>}, {transform_indices = @transform_2, window_bounds = array<i64: 8, 8, 1>}, {pipeline_mode = #tpu.pipeline_mode<synchronous>, transform_indices = @transform_3, window_bounds = array<i64: 32, 384>}, {pipeline_mode = #tpu.pipeline_mode<synchronous>, transform_indices = @transform_4, window_bounds = array<i64: 32, 32>}, {pipeline_mode = #tpu.pipeline_mode<synchronous>, transform_indices = @transform_5, window_bounds = array<i64: 1, 32>}, {pipeline_mode = #tpu.pipeline_mode<synchronous>, transform_indices = @transform_6, window_bounds = array<i64: 32, 384>}, {pipeline_mode = #tpu.pipeline_mode<synchronous>, transform_indices = @transform_7, window_bounds = array<i64: 1, 384>}, {pipeline_mode = #tpu.pipeline_mode<synchronous>, transform_indices = @transform_8, window_bounds = array<i64: 32, 32>}, {transform_indices = @transform_9, window_bounds = array<i64: 8, 32>}]} {
    %c0 = arith.constant 0 : index
    %c0_0 = arith.constant 0 : index
    %0 = vector.load %arg1[%c0, %c0_0] : memref<8x32xf32, #tpu.memory_space<vmem>>, vector<8x32xf32>
    %c0_1 = arith.constant 0 : index
    %c0_2 = arith.constant 0 : index
    %c0_3 = arith.constant 0 : index
    %1 = vector.load %arg3[%c0_1, %c0_2, %c0_3] : memref<8x8x1xf32, #tpu.memory_space<vmem>>, vector<8x8x1xf32>
    %c0_4 = arith.constant 0 : index
    %c0_5 = arith.constant 0 : index
    %2 = vector.load %arg4[%c0_4, %c0_5] : memref<32x384xf32, #tpu.memory_space<vmem>>, vector<32x384xf32>
    %cst = arith.constant dense<0.000000e+00> : vector<8x384xf32>
    %3 = tpu.matmul %0, %2, %cst {dimension_numbers = #tpu.dot_dimension_numbers<[1], [0], [0], [1], [0, 0, 1, 1], [], []>} : vector<8x32xf32>, vector<32x384xf32>, vector<8x384xf32> -> vector<8x384xf32>
    %4 = vector.extract_strided_slice %3 {offsets = [0, 0], sizes = [8, 32], strides = [1, 1]} : vector<8x384xf32> to vector<8x32xf32>
    %c0_6 = arith.constant 0 : index
    %c0_7 = arith.constant 0 : index
    %5 = vector.load %arg6[%c0_6, %c0_7] : memref<1x32xf32, #tpu.memory_space<vmem>>, vector<1x32xf32>
    %6 = vector.broadcast %5 : vector<1x32xf32> to vector<8x32xf32>
    %7 = arith.addf %4, %6 : vector<8x32xf32>
    %8 = vector.extract_strided_slice %3 {offsets = [0, 128], sizes = [8, 32], strides = [1, 1]} : vector<8x384xf32> to vector<8x32xf32>
    %9 = vector.extract_strided_slice %3 {offsets = [0, 256], sizes = [8, 32], strides = [1, 1]} : vector<8x384xf32> to vector<8x32xf32>
    %c0_8 = arith.constant 0 : index
    %c0_9 = arith.constant 0 : index
    %c0_10 = arith.constant 0 : index
    %10 = vector.load %arg2[%c0_8, %c0_9, %c0_10] : memref<8x8x32xf32, #tpu.memory_space<vmem>>, vector<8x8x32xf32>
    %11 = vector.shape_cast %10 : vector<8x8x32xf32> to vector<64x32xf32>
    %c0_11 = arith.constant 0 : index
    %c0_12 = arith.constant 0 : index
    %12 = vector.load %arg5[%c0_11, %c0_12] : memref<32x32xf32, #tpu.memory_space<vmem>>, vector<32x32xf32>
    %cst_13 = arith.constant dense<0.000000e+00> : vector<64x32xf32>
    %13 = tpu.matmul %11, %12, %cst_13 {dimension_numbers = #tpu.dot_dimension_numbers<[1], [0], [0], [1], [0, 0, 1, 1], [], []>} : vector<64x32xf32>, vector<32x32xf32>, vector<64x32xf32> -> vector<64x32xf32>
    %14 = vector.shape_cast %13 : vector<64x32xf32> to vector<8x8x32xf32>
    %15 = vector.shape_cast %7 : vector<8x32xf32> to vector<8x1x32xf32>
    %16 = vector.broadcast %15 : vector<8x1x32xf32> to vector<8x8x32xf32>
    %17 = arith.addf %16, %14 : vector<8x8x32xf32>
    %18 = arith.negf %17 : vector<8x8x32xf32>
    %19 = math.exp %18 : vector<8x8x32xf32>
    %cst_14 = arith.constant 1.000000e+00 : f32
    %20 = vector.broadcast %cst_14 : f32 to vector<8x8x32xf32>
    %21 = arith.addf %20, %19 : vector<8x8x32xf32>
    %22 = arith.divf %20, %21 : vector<8x8x32xf32>
    %23 = vector.broadcast %1 : vector<8x8x1xf32> to vector<8x8x32xf32>
    %24 = arith.mulf %22, %23 : vector<8x8x32xf32>
    %25 = math.exp %24 : vector<8x8x32xf32>
    %cst_15 = arith.constant dense<0.000000e+00> : vector<8x32xf32>
    %26 = vector.multi_reduction <add>, %25, %cst_15 [1] : vector<8x8x32xf32> to vector<8x32xf32>
    %27 = arith.mulf %10, %25 : vector<8x8x32xf32>
    %cst_16 = arith.constant dense<0.000000e+00> : vector<8x32xf32>
    %28 = vector.multi_reduction <add>, %27, %cst_16 [1] : vector<8x8x32xf32> to vector<8x32xf32>
    %29 = tpu.reciprocal %26 : vector<8x32xf32> -> vector<8x32xf32>
    %30 = arith.mulf %28, %29 : vector<8x32xf32>
    %c0_17 = arith.constant 0 : index
    %c0_18 = arith.constant 0 : index
    %31 = vector.load %arg7[%c0_17, %c0_18] : memref<32x384xf32, #tpu.memory_space<vmem>>, vector<32x384xf32>
    %cst_19 = arith.constant dense<0.000000e+00> : vector<8x384xf32>
    %32 = tpu.matmul %30, %31, %cst_19 {dimension_numbers = #tpu.dot_dimension_numbers<[1], [0], [0], [1], [0, 0, 1, 1], [], []>} : vector<8x32xf32>, vector<32x384xf32>, vector<8x384xf32> -> vector<8x384xf32>
    %c0_20 = arith.constant 0 : index
    %c0_21 = arith.constant 0 : index
    %33 = vector.load %arg8[%c0_20, %c0_21] : memref<1x384xf32, #tpu.memory_space<vmem>>, vector<1x384xf32>
    %34 = vector.broadcast %33 : vector<1x384xf32> to vector<8x384xf32>
    %35 = arith.addf %32, %34 : vector<8x384xf32>
    %36 = vector.extract_strided_slice %35 {offsets = [0, 0], sizes = [8, 32], strides = [1, 1]} : vector<8x384xf32> to vector<8x32xf32>
    %37 = arith.addf %8, %36 : vector<8x32xf32>
    %38 = arith.negf %37 : vector<8x32xf32>
    %39 = math.exp %38 : vector<8x32xf32>
    %cst_22 = arith.constant 1.000000e+00 : f32
    %40 = vector.broadcast %cst_22 : f32 to vector<8x32xf32>
    %41 = arith.addf %40, %39 : vector<8x32xf32>
    %42 = arith.divf %40, %41 : vector<8x32xf32>
    %43 = vector.extract_strided_slice %35 {offsets = [0, 128], sizes = [8, 32], strides = [1, 1]} : vector<8x384xf32> to vector<8x32xf32>
    %44 = arith.addf %9, %43 : vector<8x32xf32>
    %45 = arith.negf %44 : vector<8x32xf32>
    %46 = math.exp %45 : vector<8x32xf32>
    %cst_23 = arith.constant 1.000000e+00 : f32
    %47 = vector.broadcast %cst_23 : f32 to vector<8x32xf32>
    %48 = arith.addf %47, %46 : vector<8x32xf32>
    %49 = arith.divf %47, %48 : vector<8x32xf32>
    %50 = arith.mulf %49, %0 : vector<8x32xf32>
    %c0_24 = arith.constant 0 : index
    %c0_25 = arith.constant 0 : index
    %51 = vector.load %arg9[%c0_24, %c0_25] : memref<32x32xf32, #tpu.memory_space<vmem>>, vector<32x32xf32>
    %cst_26 = arith.constant dense<0.000000e+00> : vector<8x32xf32>
    %52 = tpu.matmul %50, %51, %cst_26 {dimension_numbers = #tpu.dot_dimension_numbers<[1], [0], [0], [1], [0, 0, 1, 1], [], []>} : vector<8x32xf32>, vector<32x32xf32>, vector<8x32xf32> -> vector<8x32xf32>
    %53 = vector.extract_strided_slice %35 {offsets = [0, 256], sizes = [8, 32], strides = [1, 1]} : vector<8x384xf32> to vector<8x32xf32>
    %54 = arith.addf %52, %53 : vector<8x32xf32>
    %55 = math.tanh %54 : vector<8x32xf32>
    %cst_27 = arith.constant 1.000000e+00 : f32
    %56 = vector.broadcast %cst_27 : f32 to vector<8x32xf32>
    %57 = arith.subf %56, %42 : vector<8x32xf32>
    %58 = arith.mulf %57, %0 : vector<8x32xf32>
    %59 = arith.mulf %42, %55 : vector<8x32xf32>
    %60 = arith.addf %58, %59 : vector<8x32xf32>
    %c0_28 = arith.constant 0 : index
    %c0_29 = arith.constant 0 : index
    %61 = vector.load %arg10[%c0_28, %c0_29] : memref<8x32xf32, #tpu.memory_space<vmem>>, vector<8x32xf32>
    tpu.vector_store %arg10[%c0_28, %c0_29], %60 {strides = array<i32>} : memref<8x32xf32, #tpu.memory_space<vmem>>, vector<8x32xf32>,
    return
  }
  func.func @transform_0(%arg0: i32) -> (i32, i32) {
    %c0_i32 = arith.constant 0 : i32
    %c0_i32_0 = arith.constant 0 : i32
    return %arg0, %c0_i32 : i32, i32
  }
  func.func @transform_1(%arg0: i32) -> (i32, i32, i32) {
    %c0_i32 = arith.constant 0 : i32
    %c0_i32_0 = arith.constant 0 : i32
    %c0_i32_1 = arith.constant 0 : i32
    return %arg0, %c0_i32, %c0_i32_0 : i32, i32, i32
  }
  func.func @transform_2(%arg0: i32) -> (i32, i32, i32) {
    %c0_i32 = arith.constant 0 : i32
    %c0_i32_0 = arith.constant 0 : i32
    %c0_i32_1 = arith.constant 0 : i32
    return %arg0, %c0_i32, %c0_i32_0 : i32, i32, i32
  }
  func.func @transform_3(%arg0: i32) -> (i32, i32) {
    %c0_i32 = arith.constant 0 : i32
    %c0_i32_0 = arith.constant 0 : i32
    %c0_i32_1 = arith.constant 0 : i32
    return %c0_i32, %c0_i32_0 : i32, i32
  }
  func.func @transform_4(%arg0: i32) -> (i32, i32) {
    %c0_i32 = arith.constant 0 : i32
    %c0_i32_0 = arith.constant 0 : i32
    %c0_i32_1 = arith.constant 0 : i32
    return %c0_i32, %c0_i32_0 : i32, i32
  }
  func.func @transform_5(%arg0: i32) -> (i32, i32) {
    %c0_i32 = arith.constant 0 : i32
    %c0_i32_0 = arith.constant 0 : i32
    %c0_i32_1 = arith.constant 0 : i32
    return %c0_i32, %c0_i32_0 : i32, i32
  }
  func.func @transform_6(%arg0: i32) -> (i32, i32) {
    %c0_i32 = arith.constant 0 : i32
    %c0_i32_0 = arith.constant 0 : i32
    %c0_i32_1 = arith.constant 0 : i32
    return %c0_i32, %c0_i32_0 : i32, i32
  }
  func.func @transform_7(%arg0: i32) -> (i32, i32) {
    %c0_i32 = arith.constant 0 : i32
    %c0_i32_0 = arith.constant 0 : i32
    %c0_i32_1 = arith.constant 0 : i32
    return %c0_i32, %c0_i32_0 : i32, i32
  }
  func.func @transform_8(%arg0: i32) -> (i32, i32) {
    %c0_i32 = arith.constant 0 : i32
    %c0_i32_0 = arith.constant 0 : i32
    %c0_i32_1 = arith.constant 0 : i32
    return %c0_i32, %c0_i32_0 : i32, i32
  }
  func.func @transform_9(%arg0: i32) -> (i32, i32) {
    %c0_i32 = arith.constant 0 : i32
    %c0_i32_0 = arith.constant 0 : i32
    return %arg0, %c0_i32 : i32, i32
  }
}

</mosaic_0001>

<llo_original>
// kernel: ggru_cell.1
$region0: #{ggru_cell.1}
  #allocation0 [shape = 'u32[]', space=smem, size = 0x4, offset = 0x4, fixed_abs, tag = 'smem constant byte address 0x4 - core index']
  #allocation1 [shape = 'u32[144,128]{1,0:T(1,128)}', space=vmem, size = 0x12000, scoped, tag = 'internal scratch']
  %s0 = inlined_call_operand.hbm [shape: f32[16,32], index: 0, kind: input, shape index: {}]
  %s1 = inlined_call_operand.vmem [shape: f32[16,8,32], index: 1, kind: input, shape index: {}]
  %s2 = inlined_call_operand.vmem [shape: f32[16,8,1], index: 2, kind: input, shape index: {}]
  %s3 = inlined_call_operand.hbm [shape: f32[32,384], index: 3, kind: input, shape index: {}]
  %s4 = inlined_call_operand.vmem [shape: f32[32,32], index: 4, kind: input, shape index: {}]
  %s5 = inlined_call_operand.vmem [shape: f32[1,32], index: 5, kind: input, shape index: {}]
  %s6 = inlined_call_operand.hbm [shape: f32[32,384], index: 6, kind: input, shape index: {}]
  %s7 = inlined_call_operand.hbm [shape: f32[1,384], index: 7, kind: input, shape index: {}]
  %s8 = inlined_call_operand.hbm [shape: f32[32,32], index: 8, kind: input, shape index: {}]
  %s9 = inlined_call_operand.hbm [shape: f32[16,32], index: 9, kind: output, shape index: {}]
  %s10 = sld [smem:[#allocation0]]
  $region89: #{ggru_cell.1} parent=0
    _
  %s12 = ssub.s32 1, %s10
  %s13 = scalar_select 0, %s12, %s10
  $region1: #{ggru_cell.1} parent=0
    #allocation2 [shape = 'u8[8192]{0}', space=vmem, size = 0x2000, scoped, tag = 'input window, operand 0']
    #allocation3 [shape = 's32[2]{0}', space=sflag, size = 0x8, scoped, tag = 'scoped memory for ggru_cell.1']
    #allocation4 [shape = 's32[2]{0}', space=sflag, size = 0x8, scoped, tag = 'scoped memory for ggru_cell.1']
    #allocation5 [shape = 'u8[49152]{0}', space=vmem, size = 0xc000, scoped, tag = 'input window, operand 3, single buffered']
    #allocation6 [shape = 's32[1]{0}', space=sflag, size = 0x4, scoped, tag = 'scoped memory for ggru_cell.1']
    #allocation7 [shape = 'u8[49152]{0}', space=vmem, size = 0xc000, scoped, tag = 'input window, operand 6, single buffered']
    #allocation8 [shape = 'u8[1536]{0}', space=vmem, size = 0x800, scoped, tag = 'input window, operand 7, single buffered']
    #allocation9 [shape = 's32[1]{0}', space=sflag, size = 0x4, scoped, tag = 'scoped memory for ggru_cell.1']
    #allocation10 [shape = 'u8[16384]{0}', space=vmem, size = 0x4000, scoped, tag = 'input window, operand 8, single buffered']
    #allocation11 [shape = 'u8[8192]{0}', space=vmem, size = 0x2000, scoped, tag = 'output window, operand 0']
    %14 = vsyncpa [#allocation3], 0
    %s15 = scalar_lea.sflag [#allocation3], 1
    %16 = vsyncpa %s15, 0
    %17 = vsyncpa [#allocation6], 0
    %18 = vsyncpa [#allocation9], 0
    %19 = vsyncpa [#allocation4], 0
    %s20 = scalar_lea.sflag [#allocation4], 1
    %21 = vsyncpa %s20, 0
    loop: start=0, step=1, limit=4
    $region2: #{ggru_cell.1} parent=1 // loop_pre_header
      _
    $region3: #{ggru_cell.1} parent=1 // loop_header
      %s23 = sphi 0, %s27
      %p24 = scmp.ge.s32.totalorder %s23, 4
      %s33 = sphi 0, %s35
      %s36 = sphi 0, %s33
      %s37 = sphi 0, %s36
      %s53 = sphi 0, %s37
      %s59 = sphi 0, %s61
      %s62 = sphi 0, %s59
      %s63 = sphi 0, %s62
      %s79 = sphi 0, %s63
      %s85 = sphi 0, %s87
      %s88 = sphi 0, %s85
      %s89 = sphi 0, %s88
      %s105 = sphi 0, %s89
      %s109 = sphi 0, %s109
      %s111 = sphi 0, %s109
      %s112 = sphi 0, %s111
      %s126 = sphi 0, %s112
      %s130 = sphi 0, %s130
      %s132 = sphi 0, %s130
      %s133 = sphi 0, %s132
      %s147 = sphi 0, %s133
      %s151 = sphi 0, %s151
      %s153 = sphi 0, %s151
      %s154 = sphi 0, %s153
      %s168 = sphi 0, %s154
      %s172 = sphi 0, %s172
      %s174 = sphi 0, %s172
      %s175 = sphi 0, %s174
      %s189 = sphi 0, %s175
      %s193 = sphi 0, %s193
      %s195 = sphi 0, %s193
      %s196 = sphi 0, %s195
      %s210 = sphi 0, %s196
      %s214 = sphi 0, %s214
      %s216 = sphi 0, %s214
      %s217 = sphi 0, %s216
      %s231 = sphi 0, %s217
      %s237 = sphi 0, %s239
      %s240 = sphi 0, %s237
      %s241 = sphi 0, %s240
      %s257 = sphi 0, %s241
    $region4: #{ggru_cell.1} parent=1 // loop_header_branch
      %26 = sbr.rel (%p24) target = $region8
    $region5: #{ggru_cell.1} parent=1 // loop_body
      %s28 = ssub.s32 %s23, 1
      %s29 = ssub.s32 %s23, 2
      %s30 = sadd.s32 %s23, 1
      %s31 = ssub.s32 %s23, %s30
      %p32 = scmp.eq.s32.totalorder %s31, 0
      %s34 = sadd.s32 %s33, 1
      %s35 = scalar_select %p32, %s33, %s34
      %p38 = pneg %p32
      %p39 = scmp.eq.s32.totalorder %s23, 1
      %p40 = por %p38, %p39
      %p41 = scmp.ne.s32.totalorder %s33, %s36
      %p42 = scmp.eq.s32.totalorder %s23, 0
      %p43 = por %p41, %p42
      %p44 = scmp.ne.s32.totalorder %s33, %s36
      %p45 = scmp.eq.s32.totalorder %s28, 1
      %p46 = por %p44, %p45
      %p47 = scmp.ne.s32.totalorder %s36, %s37
      %p48 = scmp.eq.s32.totalorder %s28, 0
      %p49 = por %p47, %p48
      %p50 = scmp.ne.s32.totalorder %s36, %s37
      %p51 = scmp.eq.s32.totalorder %s29, 1
      %p52 = por %p50, %p51
      %p54 = scmp.ne.s32.totalorder %s37, %s53
      %p55 = scmp.eq.s32.totalorder %s29, 0
      %p56 = por %p54, %p55
      %s57 = ssub.s32 %s23, %s30
      %p58 = scmp.eq.s32.totalorder %s57, 0
      %s60 = sadd.s32 %s59, 1
      %s61 = scalar_select %p58, %s59, %s60
      %p64 = pneg %p58
      %p65 = scmp.eq.s32.totalorder %s23, 1
      %p66 = por %p64, %p65
      %p67 = scmp.ne.s32.totalorder %s59, %s62
      %p68 = scmp.eq.s32.totalorder %s23, 0
      %p69 = por %p67, %p68
      %p70 = scmp.ne.s32.totalorder %s59, %s62
      %p71 = scmp.eq.s32.totalorder %s28, 1
      %p72 = por %p70, %p71
      %p73 = scmp.ne.s32.totalorder %s62, %s63
      %p74 = scmp.eq.s32.totalorder %s28, 0
      %p75 = por %p73, %p74
      %p76 = scmp.ne.s32.totalorder %s62, %s63
      %p77 = scmp.eq.s32.totalorder %s29, 1
      %p78 = por %p76, %p77
      %p80 = scmp.ne.s32.totalorder %s63, %s79
      %p81 = scmp.eq.s32.totalorder %s29, 0
      %p82 = por %p80, %p81
      %s83 = ssub.s32 %s23, %s30
      %p84 = scmp.eq.s32.totalorder %s83, 0
      %s86 = sadd.s32 %s85, 1
      %s87 = scalar_select %p84, %s85, %s86
      %p90 = pneg %p84
      %p91 = scmp.eq.s32.totalorder %s23, 1
      %p92 = por %p90, %p91
      %p93 = scmp.ne.s32.totalorder %s85, %s88
      %p94 = scmp.eq.s32.totalorder %s23, 0
      %p95 = por %p93, %p94
      %p96 = scmp.ne.s32.totalorder %s85, %s88
      %p97 = scmp.eq.s32.totalorder %s28, 1
      %p98 = por %p96, %p97
      %p99 = scmp.ne.s32.totalorder %s88, %s89
      %p100 = scmp.eq.s32.totalorder %s28, 0
      %p101 = por %p99, %p100
      %p102 = scmp.ne.s32.totalorder %s88, %s89
      %p103 = scmp.eq.s32.totalorder %s29, 1
      %p104 = por %p102, %p103
      %p106 = scmp.ne.s32.totalorder %s89, %s105
      %p107 = scmp.eq.s32.totalorder %s29, 0
      %p108 = por %p106, %p107
      %s110 = sadd.s32 %s109, 1
      %p113 = scmp.eq.s32.totalorder %s23, 1
      %p114 = scmp.ne.s32.totalorder %s109, %s111
      %p115 = scmp.eq.s32.totalorder %s23, 0
      %p116 = por %p114, %p115
      %p117 = scmp.ne.s32.totalorder %s109, %s111
      %p118 = scmp.eq.s32.totalorder %s28, 1
      %p119 = por %p117, %p118
      %p120 = scmp.ne.s32.totalorder %s111, %s112
      %p121 = scmp.eq.s32.totalorder %s28, 0
      %p122 = por %p120, %p121
      %p123 = scmp.ne.s32.totalorder %s111, %s112
      %p124 = scmp.eq.s32.totalorder %s29, 1
      %p125 = por %p123, %p124
      %p127 = scmp.ne.s32.totalorder %s112, %s126
      %p128 = scmp.eq.s32.totalorder %s29, 0
      %p129 = por %p127, %p128
      %s131 = sadd.s32 %s130, 1
      %p134 = scmp.eq.s32.totalorder %s23, 1
      %p135 = scmp.ne.s32.totalorder %s130, %s132
      %p136 = scmp.eq.s32.totalorder %s23, 0
      %p137 = por %p135, %p136
      %p138 = scmp.ne.s32.totalorder %s130, %s132
      %p139 = scmp.eq.s32.totalorder %s28, 1
      %p140 = por %p138, %p139
      %p141 = scmp.ne.s32.totalorder %s132, %s133
      %p142 = scmp.eq.s32.totalorder %s28, 0
      %p143 = por %p141, %p142
      %p144 = scmp.ne.s32.totalorder %s132, %s133
      %p145 = scmp.eq.s32.totalorder %s29, 1
      %p146 = por %p144, %p145
      %p148 = scmp.ne.s32.totalorder %s133, %s147
      %p149 = scmp.eq.s32.totalorder %s29, 0
      %p150 = por %p148, %p149
      %s152 = sadd.s32 %s151, 1
      %p155 = scmp.eq.s32.totalorder %s23, 1
      %p156 = scmp.ne.s32.totalorder %s151, %s153
      %p157 = scmp.eq.s32.totalorder %s23, 0
      %p158 = por %p156, %p157
      %p159 = scmp.ne.s32.totalorder %s151, %s153
      %p160 = scmp.eq.s32.totalorder %s28, 1
      %p161 = por %p159, %p160
      %p162 = scmp.ne.s32.totalorder %s153, %s154
      %p163 = scmp.eq.s32.totalorder %s28, 0
      %p164 = por %p162, %p163
      %p165 = scmp.ne.s32.totalorder %s153, %s154
      %p166 = scmp.eq.s32.totalorder %s29, 1
      %p167 = por %p165, %p166
      %p169 = scmp.ne.s32.totalorder %s154, %s168
      %p170 = scmp.eq.s32.totalorder %s29, 0
      %p171 = por %p169, %p170
      %s173 = sadd.s32 %s172, 1
      %p176 = scmp.eq.s32.totalorder %s23, 1
      %p177 = scmp.ne.s32.totalorder %s172, %s174
      %p178 = scmp.eq.s32.totalorder %s23, 0
      %p179 = por %p177, %p178
      %p180 = scmp.ne.s32.totalorder %s172, %s174
      %p181 = scmp.eq.s32.totalorder %s28, 1
      %p182 = por %p180, %p181
      %p183 = scmp.ne.s32.totalorder %s174, %s175
      %p184 = scmp.eq.s32.totalorder %s28, 0
      %p185 = por %p183, %p184
      %p186 = scmp.ne.s32.totalorder %s174, %s175
      %p187 = scmp.eq.s32.totalorder %s29, 1
      %p188 = por %p186, %p187
      %p190 = scmp.ne.s32.totalorder %s175, %s189
      %p191 = scmp.eq.s32.totalorder %s29, 0
      %p192 = por %p190, %p191
      %s194 = sadd.s32 %s193, 1
      %p197 = scmp.eq.s32.totalorder %s23, 1
      %p198 = scmp.ne.s32.totalorder %s193, %s195
      %p199 = scmp.eq.s32.totalorder %s23, 0
      %p200 = por %p198, %p199
      %p201 = scmp.ne.s32.totalorder %s193, %s195
      %p202 = scmp.eq.s32.totalorder %s28, 1
      %p203 = por %p201, %p202
      %p204 = scmp.ne.s32.totalorder %s195, %s196
      %p205 = scmp.eq.s32.totalorder %s28, 0
      %p206 = por %p204, %p205
      %p207 = scmp.ne.s32.totalorder %s195, %s196
      %p208 = scmp.eq.s32.totalorder %s29, 1
      %p209 = por %p207, %p208
      %p211 = scmp.ne.s32.totalorder %s196, %s210
      %p212 = scmp.eq.s32.totalorder %s29, 0
      %p213 = por %p211, %p212
      %s215 = sadd.s32 %s214, 1
      %p218 = scmp.eq.s32.totalorder %s23, 1
      %p219 = scmp.ne.s32.totalorder %s214, %s216
      %p220 = scmp.eq.s32.totalorder %s23, 0
      %p221 = por %p219, %p220
      %p222 = scmp.ne.s32.totalorder %s214, %s216
      %p223 = scmp.eq.s32.totalorder %s28, 1
      %p224 = por %p222, %p223
      %p225 = scmp.ne.s32.totalorder %s216, %s217
      %p226 = scmp.eq.s32.totalorder %s28, 0
      %p227 = por %p225, %p226
      %p228 = scmp.ne.s32.totalorder %s216, %s217
      %p229 = scmp.eq.s32.totalorder %s29, 1
      %p230 = por %p228, %p229
      %p232 = scmp.ne.s32.totalorder %s217, %s231
      %p233 = scmp.eq.s32.totalorder %s29, 0
      %p234 = por %p232, %p233
      %s235 = ssub.s32 %s23, %s30
      %p236 = scmp.eq.s32.totalorder %s235, 0
      %s238 = sadd.s32 %s237, 1
      %s239 = scalar_select %p236, %s237, %s238
      %p242 = pneg %p236
      %p243 = scmp.eq.s32.totalorder %s23, 1
      %p244 = por %p242, %p243
      %p245 = scmp.ne.s32.totalorder %s237, %s240
      %p246 = scmp.eq.s32.totalorder %s23, 0
      %p247 = por %p245, %p246
      %p248 = scmp.ne.s32.totalorder %s237, %s240
      %p249 = scmp.eq.s32.totalorder %s28, 1
      %p250 = por %p248, %p249
      %p251 = scmp.ne.s32.totalorder %s240, %s241
      %p252 = scmp.eq.s32.totalorder %s28, 0
      %p253 = por %p251, %p252
      %p254 = scmp.ne.s32.totalorder %s240, %s241
      %p255 = scmp.eq.s32.totalorder %s29, 1
      %p256 = por %p254, %p255
      %p258 = scmp.ne.s32.totalorder %s241, %s257
      %p259 = scmp.eq.s32.totalorder %s29, 0
      %p260 = por %p258, %p259
      %p261 = scmp.le.s32.totalorder 1, %s23
      %p262 = scmp.lt.s32.totalorder %s23, 3
      %p263 = pnand %p261, %p262
      %p264 = pneg %p263
      // Predicated region
      $region9: #{ggru_cell.1} parent=5 // pred_check
        _
      $region10: #{ggru_cell.1} parent=5 // pred_check_branch
        %266 = sbr.rel (%p263) target = $region12
      $region11: #{ggru_cell.1} parent=5 // pred_region
        %s267 = ssub.s32 %s23, 1
        // Predicated region
        $region13: #{ggru_cell.1} parent=11 // pred_check
          %p268 = pneg %p122
        $region14: #{ggru_cell.1} parent=11 // pred_check_branch
          %270 = sbr.rel (%p268) target = $region16
        $region15: #{ggru_cell.1} parent=11 // pred_region
          %s272 = ssub.s32 1536, 1536
          %273 = vsyncadd [#allocation6], %s272
          %s274 = sshll.u32 [#allocation5], 4
          %s275 = int_to_ptr.vmem [resolvable:$true] %s274
          %280 = dma.hbm_to_vmem [thread:$0]  %s3, 1536, %s275, [#allocation6], 384, 384, 24
        $region16: #{ggru_cell.1} parent=11 // pred_fallthru
          _
        // Predicated region
        $region17: #{ggru_cell.1} parent=11 // pred_check
          %p281 = pneg %p143
        $region18: #{ggru_cell.1} parent=11 // pred_check_branch
          %283 = sbr.rel (%p281) target = $region20
        $region19: #{ggru_cell.1} parent=11 // pred_region
          _
        $region20: #{ggru_cell.1} parent=11 // pred_fallthru
          _
        // Predicated region
        $region21: #{ggru_cell.1} parent=11 // pred_check
          %p284 = pneg %p164
        $region22: #{ggru_cell.1} parent=11 // pred_check_branch
          %286 = sbr.rel (%p284) target = $region24
        $region23: #{ggru_cell.1} parent=11 // pred_region
          _
        $region24: #{ggru_cell.1} parent=11 // pred_fallthru
          _
        // Predicated region
        $region25: #{ggru_cell.1} parent=11 // pred_check
          %p287 = pneg %p185
        $region26: #{ggru_cell.1} parent=11 // pred_check_branch
          %289 = sbr.rel (%p287) target = $region28
        $region27: #{ggru_cell.1} parent=11 // pred_region
          %s291 = ssub.s32 1536, 1536
          %292 = vsyncadd [#allocation6], %s291
          %s293 = sshll.u32 [#allocation7], 4
          %s294 = int_to_ptr.vmem [resolvable:$true] %s293
          %299 = dma.hbm_to_vmem [thread:$0]  %s6, 1536, %s294, [#allocation6], 384, 384, 24
        $region28: #{ggru_cell.1} parent=11 // pred_fallthru
          _
        // Predicated region
        $region29: #{ggru_cell.1} parent=11 // pred_check
          %p300 = pneg %p206
        $region30: #{ggru_cell.1} parent=11 // pred_check_branch
          %302 = sbr.rel (%p300) target = $region32
        $region31: #{ggru_cell.1} parent=11 // pred_region
          %s304 = ssub.s32 48, 48
          %305 = vsyncadd [#allocation9], %s304
          %s307 = sshll.u32 [#allocation8], 4
          %s308 = int_to_ptr.vmem [resolvable:$true] %s307
          %310 = dma.hbm_to_vmem [thread:$0]  %s7, 48, %s308, [#allocation9]
        $region32: #{ggru_cell.1} parent=11 // pred_fallthru
          _
        // Predicated region
        $region33: #{ggru_cell.1} parent=11 // pred_check
          %p311 = pneg %p227
        $region34: #{ggru_cell.1} parent=11 // pred_check_branch
          %313 = sbr.rel (%p311) target = $region36
        $region35: #{ggru_cell.1} parent=11 // pred_region
          %s315 = ssub.s32 512, 512
          %316 = vsyncadd [#allocation9], %s315
          %s317 = sshll.u32 [#allocation10], 4
          %s318 = int_to_ptr.vmem [resolvable:$true] %s317
          %323 = dma.hbm_to_vmem [thread:$0]  %s8, 512, %s318, [#allocation9], 128, 128, 8
        $region36: #{ggru_cell.1} parent=11 // pred_fallthru
          _
      $region12: #{ggru_cell.1} parent=5 // pred_fallthru
        _
      %p324 = scmp.lt.s32.totalorder %s23, 2
      // Predicated region
      $region37: #{ggru_cell.1} parent=5 // pred_check
        %p325 = pneg %p324
      $region38: #{ggru_cell.1} parent=5 // pred_check_branch
        %327 = sbr.rel (%p325) target = $region40
      $region39: #{ggru_cell.1} parent=5 // pred_region
        // Predicated region
        $region41: #{ggru_cell.1} parent=39 // pred_check
          %p328 = pneg %p43
        $region42: #{ggru_cell.1} parent=39 // pred_check_branch
          %330 = sbr.rel (%p328) target = $region44
        $region43: #{ggru_cell.1} parent=39 // pred_region
          %s331 = sand.u32 %s33, 1
          %s332 = scalar_lea.sflag [#allocation3], %s331
          %s333 = sand.u32 %s33, 1
          %s334 = smul.addr %s333, 8
          %s335 = scalar_lea.vmem [#allocation2], %s334
          %s337 = ssub.s32 128, 128
          %338 = vsyncadd %s332, %s337
          %s339 = smul.addr %s23, 128
          %s340 = scalar_lea.hbm %s0, %s339
          %s342 = sshll.u32 %s335, 4
          %s343 = int_to_ptr.vmem [resolvable:$true] %s342
          %345 = dma.hbm_to_vmem [thread:$0]  %s340, 128, %s343, %s332
        $region44: #{ggru_cell.1} parent=39 // pred_fallthru
          _
        // Predicated region
        $region45: #{ggru_cell.1} parent=39 // pred_check
          %p346 = pneg %p69
        $region46: #{ggru_cell.1} parent=39 // pred_check_branch
          %348 = sbr.rel (%p346) target = $region48
        $region47: #{ggru_cell.1} parent=39 // pred_region
          %s349 = smul.u32 8, %s23
          %p350 = scmp.lt.s32.totalorder %s349, 15
          %s351 = scalar_select %p350, %s349, 15
          %s352 = smul.addr %s351, 8
          %s353 = scalar_lea.vmem %s1, %s352
          %s354 = smul.u32 8, %s23
        $region48: #{ggru_cell.1} parent=39 // pred_fallthru
          _
        // Predicated region
        $region49: #{ggru_cell.1} parent=39 // pred_check
          %p355 = pneg %p95
        $region50: #{ggru_cell.1} parent=39 // pred_check_branch
          %357 = sbr.rel (%p355) target = $region52
        $region51: #{ggru_cell.1} parent=39 // pred_region
          %s358 = smul.u32 8, %s23
          %p359 = scmp.lt.s32.totalorder %s358, 15
          %s360 = scalar_select %p359, %s358, 15
          %s361 = smul.addr %s360, 8
          %s362 = scalar_lea.vmem %s2, %s361
          %s363 = smul.u32 8, %s23
        $region52: #{ggru_cell.1} parent=39 // pred_fallthru
          _
      $region40: #{ggru_cell.1} parent=5 // pred_fallthru
        _
      %p364 = scmp.le.s32.totalorder 1, %s23
      %p365 = scmp.lt.s32.totalorder %s23, 3
      %p366 = pnand %p364, %p365
      %p367 = pneg %p366
      // Predicated region
      $region53: #{ggru_cell.1} parent=5 // pred_check
        _
      $region54: #{ggru_cell.1} parent=5 // pred_check_branch
        %369 = sbr.rel (%p366) target = $region56
      $region55: #{ggru_cell.1} parent=5 // pred_region
        %s370 = ssub.s32 %s23, 1
        %s371 = sand.u32 %s36, 1
        %s372 = scalar_lea.sflag [#allocation3], %s371
        %s373 = sand.u32 %s36, 1
        %s374 = smul.addr %s373, 8
        %s375 = scalar_lea.vmem [#allocation2], %s374
        // Predicated region
        $region57: #{ggru_cell.1} parent=55 // pred_check
          %p376 = pneg %p49
        $region58: #{ggru_cell.1} parent=55 // pred_check_branch
          %378 = sbr.rel (%p376) target = $region60
        $region59: #{ggru_cell.1} parent=55 // pred_region
          %379 = dma.done %s372, 128
        $region60: #{ggru_cell.1} parent=55 // pred_fallthru
          _
        // Predicated region
        $region61: #{ggru_cell.1} parent=55 // pred_check
          %p380 = pneg %p122
        $region62: #{ggru_cell.1} parent=55 // pred_check_branch
          %382 = sbr.rel (%p380) target = $region64
        $region63: #{ggru_cell.1} parent=55 // pred_region
          %383 = dma.done [#allocation6], 1536
        $region64: #{ggru_cell.1} parent=55 // pred_fallthru
          _
        // Predicated region
        $region65: #{ggru_cell.1} parent=55 // pred_check
          %p384 = pneg %p185
        $region66: #{ggru_cell.1} parent=55 // pred_check_branch
          %386 = sbr.rel (%p384) target = $region68
        $region67: #{ggru_cell.1} parent=55 // pred_region
          %387 = dma.done [#allocation6], 1536
        $region68: #{ggru_cell.1} parent=55 // pred_fallthru
          _
        // Predicated region
        $region69: #{ggru_cell.1} parent=55 // pred_check
          %p388 = pneg %p206
        $region70: #{ggru_cell.1} parent=55 // pred_check_branch
          %390 = sbr.rel (%p388) target = $region72
        $region71: #{ggru_cell.1} parent=55 // pred_region
          %391 = dma.done [#allocation9], 48
        $region72: #{ggru_cell.1} parent=55 // pred_fallthru
          _
        // Predicated region
        $region73: #{ggru_cell.1} parent=55 // pred_check
          %p392 = pneg %p227
        $region74: #{ggru_cell.1} parent=55 // pred_check_branch
          %394 = sbr.rel (%p392) target = $region76
        $region75: #{ggru_cell.1} parent=55 // pred_region
          %395 = dma.done [#allocation9], 512
        $region76: #{ggru_cell.1} parent=55 // pred_fallthru
          _
        %s396 = sand.u32 %s36, 1
        %s397 = scalar_lea.sflag [#allocation3], %s396
        %s398 = sand.u32 %s36, 1
        %s399 = smul.addr %s398, 8
        %s400 = scalar_lea.vmem [#allocation2], %s399
        %p401 = pneg %p49
        %p402 = pneg %p46
        %s403 = smul.u32 8, %s28
        %p404 = scmp.lt.s32.totalorder %s403, 15
        %s405 = scalar_select %p404, %s403, 15
        %s406 = smul.addr %s405, 8
        %s407 = scalar_lea.vmem %s1, %s406
        %p408 = pneg %p75
        %p409 = pneg %p72
        %s410 = smul.u32 8, %s28
        %p411 = scmp.lt.s32.totalorder %s410, 15
        %s412 = scalar_select %p411, %s410, 15
        %s413 = smul.addr %s412, 8
        %s414 = scalar_lea.vmem %s2, %s413
        %p415 = pneg %p101
        %p416 = pneg %p98
        %p417 = pneg %p122
        %p418 = pneg %p119
        %p419 = pneg %p143
        %p420 = pneg %p140
        %p421 = pneg %p164
        %p422 = pneg %p161
        %p423 = pneg %p185
        %p424 = pneg %p182
        %p425 = pneg %p206
        %p426 = pneg %p203
        %p427 = pneg %p227
        %p428 = pneg %p224
        %p429 = pneg %p253
        %p430 = pneg %p250
        %s431 = sand.u32 %s240, 1
        %s432 = scalar_lea.sflag [#allocation4], %s431
        %s433 = sand.u32 %s240, 1
        %s434 = smul.addr %s433, 8
        %s435 = scalar_lea.vmem [#allocation11], %s434
        %s436 = smul.u32 8, %s28
        %p437 = scmp.lt.s32.totalorder %s436, 15
        %s438 = scalar_select %p437, %s436, 15
        %s439 = smul.addr %s438, 8
        %s440 = scalar_lea.vmem %s1, %s439
        %s441 = smul.u32 8, %s28
        %s442 = smul.u32 8, %s28
        %p443 = scmp.lt.s32.totalorder %s442, 15
        %s444 = scalar_select %p443, %s442, 15
        %s445 = smul.addr %s444, 8
        %s446 = scalar_lea.vmem %s2, %s445
        %s447 = smul.u32 8, %s28
        %v448 = vld [vmem:[%s375] sm:$0xff]
        %v449 = vld [vmem:[%s446] sm:$0xff]
        %v450 = vld [vmem:[%s446 + $0x8] sm:$0xff]
        %v451 = vld [vmem:[%s446 + $0x10] sm:$0xff]
        %v452 = vld [vmem:[%s446 + $0x18] sm:$0xff]
        %v453 = vld [vmem:[%s446 + $0x20] sm:$0xff]
        %v454 = vld [vmem:[%s446 + $0x28] sm:$0xff]
        %v455 = vld [vmem:[%s446 + $0x30] sm:$0xff]
        %v456 = vld [vmem:[%s446 + $0x38] sm:$0xff]
        %v457 = vld [vmem:[#allocation5] sm:$0xff]
        %v458 = vld [vmem:[#allocation5 + $0x8] sm:$0xff]
        %v459 = vld [vmem:[#allocation5 + $0x10] sm:$0xff]
        %v460 = vld [vmem:[#allocation5 + $0x18] sm:$0xff]
        %v461 = vld [vmem:[#allocation5 + $0x20] sm:$0xff]
        %v462 = vld [vmem:[#allocation5 + $0x28] sm:$0xff]
        %v463 = vld [vmem:[#allocation5 + $0x30] sm:$0xff]
        %v464 = vld [vmem:[#allocation5 + $0x38] sm:$0xff]
        %v465 = vld [vmem:[#allocation5 + $0x40] sm:$0xff]
        %v466 = vld [vmem:[#allocation5 + $0x48] sm:$0xff]
        %v467 = vld [vmem:[#allocation5 + $0x50] sm:$0xff]
        %v468 = vld [vmem:[#allocation5 + $0x58] sm:$0xff]
        %vm469 = vcmask 261120
        %v471 = vsel %vm469, %v448, 0
        %473 = vmatprep.subr.mxu0 %v458
        %474 = vmatpush1.msra.mxu0 %v457
        %475 = vmatprep.subr.mxu0 %v461
        %476 = vmatpush1.msra.mxu0 %v460
        %477 = vmatprep.subr.mxu0 %v464
        %478 = vmatpush1.msra.mxu0 %v463
        %479 = vmatprep.subr.mxu0 %v467
        %480 = vmatpush1.msra.mxu0 %v466
        %481 = vmatprep.subr.mxu0 0.0
        %482 = vmatpush1.msra.mxu0 0.0
        %483 = vmatprep.subr.mxu0 0.0
        %484 = vmatpush1.msra.mxu0 0.0
        %485 = vmatprep.subr.mxu0 0.0
        %486 = vmatpush1.msra.mxu0 0.0
        %487 = vmatprep.subr.mxu0 0.0
        %488 = vmatpush1.msra.mxu0 0.0
        %489 = vmatprep.subr.mxu0 0.0
        %490 = vmatpush1.msra.mxu0 0.0
        %491 = vmatprep.subr.mxu0 0.0
        %492 = vmatpush1.msra.mxu0 0.0
        %493 = vmatprep.subr.mxu0 0.0
        %494 = vmatpush1.msra.mxu0 0.0
        %495 = vmatprep.subr.mxu0 0.0
        %496 = vmatpush1.msra.mxu0 0.0
        %497 = vmatprep.subr.mxu0 0.0
        %498 = vmatpush1.msra.mxu0 0.0
        %499 = vmatprep.subr.mxu0 0.0
        %500 = vmatpush1.msra.mxu0 0.0
        %501 = vmatprep.subr.mxu0 0.0
        %502 = vmatpush1.msra.mxu0 0.0
        %503 = vmatprep.subr.mxu0 0.0
        %504 = vmatpush1.msra.mxu0 0.0
        %505 = vmatprep.subr.mxu0 0.0
        %506 = vmatpush1.msra.mxu0 0.0
        %507 = vmatprep.subr.mxu0 0.0
        %508 = vmatpush1.msra.mxu0 0.0
        %509 = vmatprep.subr.mxu0 0.0
        %510 = vmatpush1.msra.mxu0 0.0
        %511 = vmatprep.subr.mxu0 0.0
        %512 = vmatpush1.msra.mxu0 0.0
        %513 = vmatprep.subr.mxu0 0.0
        %514 = vmatpush1.msra.mxu0 0.0
        %515 = vmatprep.subr.mxu0 0.0
        %516 = vmatpush1.msra.mxu0 0.0
        %517 = vmatprep.subr.mxu0 0.0
        %518 = vmatpush1.msra.mxu0 0.0
        %519 = vmatprep.subr.mxu0 0.0
        %520 = vmatpush1.msra.mxu0 0.0
        %521 = vmatprep.subr.mxu0 0.0
        %522 = vmatpush1.msra.mxu0 0.0
        %523 = vmatprep.subr.mxu0 0.0
        %524 = vmatpush1.msra.mxu0 0.0
        %525 = vmatprep.subr.mxu0 0.0
        %526 = vmatpush1.msra.mxu0 0.0
        %527 = vmatprep.subr.mxu0 0.0
        %528 = vmatpush1.msra.mxu0 0.0
        %529 = vmatprep.subr.mxu0 0.0
        %530 = vmatpush1.msra.mxu0 0.0
        %531 = vmatprep.subr.mxu0 0.0
        %532 = vmatpush1.msra.mxu0 0.0
        %533 = vmatprep.subr.mxu0 0.0
        %534 = vmatpush1.msra.mxu0 0.0
        %535 = vmatprep.subr.mxu0 0.0
        %536 = vmatpush1.msra.mxu0 0.0
        %537 = vmatprep.mubr.f32.mxu0 0.0
        %538 = vmatmul.mubr.f32.gmra.mrb[0].mxu0 %v471
        %v539 = vpop.f32.mrb[0].mxu0
        %v540 = vadd.f32 0.0, %v539
        %v541 = vpop.f32.mrb[0].mxu0
        %v542 = vadd.f32 0.0, %v541
        %543 = vdwg.mxu0
        %544 = vmatprep.subr.mxu0 0.0
        %545 = vmatpush1.msra.mxu0 %v459
        %546 = vmatprep.subr.mxu0 0.0
        %547 = vmatpush1.msra.mxu0 %v462
        %548 = vmatprep.subr.mxu0 0.0
        %549 = vmatpush1.msra.mxu0 %v465
        %550 = vmatprep.subr.mxu0 0.0
        %551 = vmatpush1.msra.mxu0 %v468
        %552 = vmatprep.subr.mxu0 0.0
        %553 = vmatpush1.msra.mxu0 0.0
        %554 = vmatprep.subr.mxu0 0.0
        %555 = vmatpush1.msra.mxu0 0.0
        %556 = vmatprep.subr.mxu0 0.0
        %557 = vmatpush1.msra.mxu0 0.0
        %558 = vmatprep.subr.mxu0 0.0
        %559 = vmatpush1.msra.mxu0 0.0
        %560 = vmatprep.subr.mxu0 0.0
        %561 = vmatpush1.msra.mxu0 0.0
        %562 = vmatprep.subr.mxu0 0.0
        %563 = vmatpush1.msra.mxu0 0.0
        %564 = vmatprep.subr.mxu0 0.0
        %565 = vmatpush1.msra.mxu0 0.0
        %566 = vmatprep.subr.mxu0 0.0
        %567 = vmatpush1.msra.mxu0 0.0
        %568 = vmatprep.subr.mxu0 0.0
        %569 = vmatpush1.msra.mxu0 0.0
        %570 = vmatprep.subr.mxu0 0.0
        %571 = vmatpush1.msra.mxu0 0.0
        %572 = vmatprep.subr.mxu0 0.0
        %573 = vmatpush1.msra.mxu0 0.0
        %574 = vmatprep.subr.mxu0 0.0
        %575 = vmatpush1.msra.mxu0 0.0
        %576 = vmatprep.subr.mxu0 0.0
        %577 = vmatpush1.msra.mxu0 0.0
        %578 = vmatprep.subr.mxu0 0.0
        %579 = vmatpush1.msra.mxu0 0.0
        %580 = vmatprep.subr.mxu0 0.0
        %581 = vmatpush1.msra.mxu0 0.0
        %582 = vmatprep.subr.mxu0 0.0
        %583 = vmatpush1.msra.mxu0 0.0
        %584 = vmatprep.subr.mxu0 0.0
        %585 = vmatpush1.msra.mxu0 0.0
        %586 = vmatprep.subr.mxu0 0.0
        %587 = vmatpush1.msra.mxu0 0.0
        %588 = vmatprep.subr.mxu0 0.0
        %589 = vmatpush1.msra.mxu0 0.0
        %590 = vmatprep.subr.mxu0 0.0
        %591 = vmatpush1.msra.mxu0 0.0
        %592 = vmatprep.subr.mxu0 0.0
        %593 = vmatpush1.msra.mxu0 0.0
        %594 = vmatprep.subr.mxu0 0.0
        %595 = vmatpush1.msra.mxu0 0.0
        %596 = vmatprep.subr.mxu0 0.0
        %597 = vmatpush1.msra.mxu0 0.0
        %598 = vmatprep.subr.mxu0 0.0
        %599 = vmatpush1.msra.mxu0 0.0
        %600 = vmatprep.subr.mxu0 0.0
        %601 = vmatpush1.msra.mxu0 0.0
        %602 = vmatprep.subr.mxu0 0.0
        %603 = vmatpush1.msra.mxu0 0.0
        %604 = vmatprep.subr.mxu0 0.0
        %605 = vmatpush1.msra.mxu0 0.0
        %606 = vmatprep.subr.mxu0 0.0
        %607 = vmatpush1.msra.mxu0 0.0
        %608 = vmatprep.mubr.f32.mxu0 0.0
        %609 = vmatmul.mubr.f32.gmra.mrb[0].mxu0 %v471
        %v610 = vpop.f32.mrb[0].mxu0
        %v611 = vadd.f32 0.0, %v610
        %v612 = vpop.f32.mrb[0].mxu0
        %613 = vdwg.mxu0
        %v614 = vld [vmem:[%s5] sm:$0x1]
        %v616 = vlaneseq
        %v617 = vshrl.u32 %v616, 7
        %v618 = vsub.s32 0, %v617
        %v619 = vrot.slane %v614, %v618
        %v621 = vadd.f32 %v540, %v619
        %v622 = vld [vmem:[%s440] sm:$0xff]
        %v623 = vld [vmem:[%s440 + $0x8] sm:$0xff]
        %v624 = vld [vmem:[%s440 + $0x10] sm:$0xff]
        %v625 = vld [vmem:[%s440 + $0x18] sm:$0xff]
        %v626 = vld [vmem:[%s440 + $0x20] sm:$0xff]
        %v627 = vld [vmem:[%s440 + $0x28] sm:$0xff]
        %v628 = vld [vmem:[%s440 + $0x30] sm:$0xff]
        %v629 = vld [vmem:[%s440 + $0x38] sm:$0xff]
        %v630 = vld [vmem:[%s4] sm:$0xff]
        %v631 = vld [vmem:[%s4 + $0x8] sm:$0xff]
        %v632 = vld [vmem:[%s4 + $0x10] sm:$0xff]
        %v633 = vld [vmem:[%s4 + $0x18] sm:$0xff]
        %v635 = vsel %vm469, %v622, 0
        %v638 = vsel %vm469, %v623, 0
        %v641 = vsel %vm469, %v624, 0
        %v644 = vsel %vm469, %v625, 0
        %v647 = vsel %vm469, %v626, 0
        %v650 = vsel %vm469, %v627, 0
        %v653 = vsel %vm469, %v628, 0
        %v656 = vsel %vm469, %v629, 0
        %658 = vmatprep.subr.mxu0 0.0
        %659 = vmatpush1.msra.mxu0 %v630
        %660 = vmatprep.subr.mxu0 0.0
        %661 = vmatpush1.msra.mxu0 %v631
        %662 = vmatprep.subr.mxu0 0.0
        %663 = vmatpush1.msra.mxu0 %v632
        %664 = vmatprep.subr.mxu0 0.0
        %665 = vmatpush1.msra.mxu0 %v633
        %666 = vmatprep.subr.mxu0 0.0
        %667 = vmatpush1.msra.mxu0 0.0
        %668 = vmatprep.subr.mxu0 0.0
        %669 = vmatpush1.msra.mxu0 0.0
        %670 = vmatprep.subr.mxu0 0.0
        %671 = vmatpush1.msra.mxu0 0.0
        %672 = vmatprep.subr.mxu0 0.0
        %673 = vmatpush1.msra.mxu0 0.0
        %674 = vmatprep.subr.mxu0 0.0
        %675 = vmatpush1.msra.mxu0 0.0
        %676 = vmatprep.subr.mxu0 0.0
        %677 = vmatpush1.msra.mxu0 0.0
        %678 = vmatprep.subr.mxu0 0.0
        %679 = vmatpush1.msra.mxu0 0.0
        %680 = vmatprep.subr.mxu0 0.0
        %681 = vmatpush1.msra.mxu0 0.0
        %682 = vmatprep.subr.mxu0 0.0
        %683 = vmatpush1.msra.mxu0 0.0
        %684 = vmatprep.subr.mxu0 0.0
        %685 = vmatpush1.msra.mxu0 0.0
        %686 = vmatprep.subr.mxu0 0.0
        %687 = vmatpush1.msra.mxu0 0.0
        %688 = vmatprep.subr.mxu0 0.0
        %689 = vmatpush1.msra.mxu0 0.0
        %690 = vmatprep.subr.mxu0 0.0
        %691 = vmatpush1.msra.mxu0 0.0
        %692 = vmatprep.subr.mxu0 0.0
        %693 = vmatpush1.msra.mxu0 0.0
        %694 = vmatprep.subr.mxu0 0.0
        %695 = vmatpush1.msra.mxu0 0.0
        %696 = vmatprep.subr.mxu0 0.0
        %697 = vmatpush1.msra.mxu0 0.0
        %698 = vmatprep.subr.mxu0 0.0
        %699 = vmatpush1.msra.mxu0 0.0
        %700 = vmatprep.subr.mxu0 0.0
        %701 = vmatpush1.msra.mxu0 0.0
        %702 = vmatprep.subr.mxu0 0.0
        %703 = vmatpush1.msra.mxu0 0.0
        %704 = vmatprep.subr.mxu0 0.0
        %705 = vmatpush1.msra.mxu0 0.0
        %706 = vmatprep.subr.mxu0 0.0
        %707 = vmatpush1.msra.mxu0 0.0
        %708 = vmatprep.subr.mxu0 0.0
        %709 = vmatpush1.msra.mxu0 0.0
        %710 = vmatprep.subr.mxu0 0.0
        %711 = vmatpush1.msra.mxu0 0.0
        %712 = vmatprep.subr.mxu0 0.0
        %713 = vmatpush1.msra.mxu0 0.0
        %714 = vmatprep.subr.mxu0 0.0
        %715 = vmatpush1.msra.mxu0 0.0
        %716 = vmatprep.subr.mxu0 0.0
        %717 = vmatpush1.msra.mxu0 0.0
        %718 = vmatprep.subr.mxu0 0.0
        %719 = vmatpush1.msra.mxu0 0.0
        %720 = vmatprep.subr.mxu0 0.0
        %721 = vmatpush1.msra.mxu0 0.0
        %722 = vmatprep.mubr.f32.mxu0 0.0
        %723 = vmatmul.mubr.f32.gmra.mrb[0].mxu0 %v635
        %v724 = vpop.f32.mrb[0].mxu0
        %v725 = vadd.f32 0.0, %v724
        %v726 = vpop.f32.mrb[0].mxu0
        %727 = vmatprep.mubr.f32.mxu0 0.0
        %728 = vmatmul.mubr.f32.gmra.mrb[0].mxu0 %v638
        %v729 = vpop.f32.mrb[0].mxu0
        %v730 = vadd.f32 0.0, %v729
        %v731 = vpop.f32.mrb[0].mxu0
        %732 = vmatprep.mubr.f32.mxu0 0.0
        %733 = vmatmul.mubr.f32.gmra.mrb[0].mxu0 %v641
        %v734 = vpop.f32.mrb[0].mxu0
        %v735 = vadd.f32 0.0, %v734
        %v736 = vpop.f32.mrb[0].mxu0
        %737 = vmatprep.mubr.f32.mxu0 0.0
        %738 = vmatmul.mubr.f32.gmra.mrb[0].mxu0 %v644
        %v739 = vpop.f32.mrb[0].mxu0
        %v740 = vadd.f32 0.0, %v739
        %v741 = vpop.f32.mrb[0].mxu0
        %742 = vmatprep.mubr.f32.mxu0 0.0
        %743 = vmatmul.mubr.f32.gmra.mrb[0].mxu0 %v647
        %v744 = vpop.f32.mrb[0].mxu0
        %v745 = vadd.f32 0.0, %v744
        %v746 = vpop.f32.mrb[0].mxu0
        %747 = vmatprep.mubr.f32.mxu0 0.0
        %748 = vmatmul.mubr.f32.gmra.mrb[0].mxu0 %v650
        %v749 = vpop.f32.mrb[0].mxu0
        %v750 = vadd.f32 0.0, %v749
        %v751 = vpop.f32.mrb[0].mxu0
        %752 = vmatprep.mubr.f32.mxu0 0.0
        %753 = vmatmul.mubr.f32.gmra.mrb[0].mxu0 %v653
        %v754 = vpop.f32.mrb[0].mxu0
        %v755 = vadd.f32 0.0, %v754
        %v756 = vpop.f32.mrb[0].mxu0
        %757 = vmatprep.mubr.f32.mxu0 0.0
        %758 = vmatmul.mubr.f32.gmra.mrb[0].mxu0 %v656
        %v759 = vpop.f32.mrb[0].mxu0
        %v760 = vadd.f32 0.0, %v759
        %v761 = vpop.f32.mrb[0].mxu0
        %762 = vdwg.mxu0
        %v764 = vcombine.high %v621, %v621
        %v766 = vunpack.c.l.s4 1966171168
        %v767 = vunpack.c.0.s8 %v766
        %v768 = vlaneseq
        %v769 = vshrl.u32 %v768, 7
        %v770 = vsub.s32 %v767, %v769
        %v771 = vrot.slane %v621, %v770
        %v773 = vunpack.c.l.s4 1966171168
        %v774 = vunpack.c.0.s8 %v773
        %v775 = vlaneseq
        %v776 = vshrl.u32 %v775, 7
        %v777 = vsub.s32 %v774, %v776
        %v778 = vrot.slane %v764, %v777
        %v779 = vcombine.high %v771, %v771
        %v780 = vcombine.high %v778, %v778
        %v782 = vunpack.c.l.s4 1966171168
        %v783 = vunpack.c.0.s8 %v782
        %v784 = vlaneseq
        %v785 = vshrl.u32 %v784, 7
        %v786 = vsub.s32 %v783, %v785
        %v787 = vrot.slane %v771, %v786
        %v789 = vunpack.c.l.s4 1966171168
        %v790 = vunpack.c.0.s8 %v789
        %v791 = vlaneseq
        %v792 = vshrl.u32 %v791, 7
        %v793 = vsub.s32 %v790, %v792
        %v794 = vrot.slane %v778, %v793
        %v796 = vunpack.c.l.s4 1966171168
        %v797 = vunpack.c.0.s8 %v796
        %v798 = vlaneseq
        %v799 = vshrl.u32 %v798, 7
        %v800 = vsub.s32 %v797, %v799
        %v801 = vrot.slane %v779, %v800
        %v803 = vunpack.c.l.s4 1966171168
        %v804 = vunpack.c.0.s8 %v803
        %v805 = vlaneseq
        %v806 = vshrl.u32 %v805, 7
        %v807 = vsub.s32 %v804, %v806
        %v808 = vrot.slane %v780, %v807
        %v809 = vcombine.high %v787, %v787
        %v810 = vcombine.high %v794, %v794
        %v811 = vcombine.high %v801, %v801
        %v812 = vcombine.high %v808, %v808
        %v813 = vlaneseq
        %v814 = vshrl.u32 %v813, 7
        %v815 = vsub.s32 0, %v814
        %v816 = vrot.slane %v787, %v815
        %v817 = vlaneseq
        %v818 = vshrl.u32 %v817, 7
        %v819 = vsub.s32 0, %v818
        %v820 = vrot.slane %v801, %v819
        %v821 = vlaneseq
        %v822 = vshrl.u32 %v821, 7
        %v823 = vsub.s32 0, %v822
        %v824 = vrot.slane %v809, %v823
        %v825 = vlaneseq
        %v826 = vshrl.u32 %v825, 7
        %v827 = vsub.s32 0, %v826
        %v828 = vrot.slane %v811, %v827
        %v829 = vlaneseq
        %v830 = vshrl.u32 %v829, 7
        %v831 = vsub.s32 0, %v830
        %v832 = vrot.slane %v794, %v831
        %v833 = vlaneseq
        %v834 = vshrl.u32 %v833, 7
        %v835 = vsub.s32 0, %v834
        %v836 = vrot.slane %v808, %v835
        %v837 = vlaneseq
        %v838 = vshrl.u32 %v837, 7
        %v839 = vsub.s32 0, %v838
        %v840 = vrot.slane %v810, %v839
        %v841 = vlaneseq
        %v842 = vshrl.u32 %v841, 7
        %v843 = vsub.s32 0, %v842
        %v844 = vrot.slane %v812, %v843
        %v853 = vadd.f32 %v816, %v725
        %v854 = vadd.f32 %v820, %v730
        %v855 = vadd.f32 %v824, %v735
        %v856 = vadd.f32 %v828, %v740
        %v857 = vadd.f32 %v832, %v745
        %v858 = vadd.f32 %v836, %v750
        %v859 = vadd.f32 %v840, %v755
        %v860 = vadd.f32 %v844, %v760
        %v861 = vxor.u32 %v853, 2147483648
        %v862 = vxor.u32 %v854, 2147483648
        %v863 = vxor.u32 %v855, 2147483648
        %v864 = vxor.u32 %v856, 2147483648
        %v865 = vxor.u32 %v857, 2147483648
        %v866 = vxor.u32 %v858, 2147483648
        %v867 = vxor.u32 %v859, 2147483648
        %v868 = vxor.u32 %v860, 2147483648
        %v869 = vmul.f32 %v861, 1.442695
        %v870 = vpow.pop %v869
        %v871 = vmul.f32 %v862, 1.442695
        %v872 = vpow.pop %v871
        %v873 = vmul.f32 %v863, 1.442695
        %v874 = vpow.pop %v873
        %v875 = vmul.f32 %v864, 1.442695
        %v876 = vpow.pop %v875
        %v877 = vmul.f32 %v865, 1.442695
        %v878 = vpow.pop %v877
        %v879 = vmul.f32 %v866, 1.442695
        %v880 = vpow.pop %v879
        %v881 = vmul.f32 %v867, 1.442695
        %v882 = vpow.pop %v881
        %v883 = vmul.f32 %v868, 1.442695
        %v884 = vpow.pop %v883
        %v885 = vadd.f32 %v870, 1.0
        %v886 = vadd.f32 %v872, 1.0
        %v887 = vadd.f32 %v874, 1.0
        %v888 = vadd.f32 %v876, 1.0
        %v889 = vadd.f32 %v878, 1.0
        %v890 = vadd.f32 %v880, 1.0
        %v891 = vadd.f32 %v882, 1.0
        %v892 = vadd.f32 %v884, 1.0
        %v893 = vrcp.pop %v885
        %v894 = vmul.f32 1.0, %v893
        %v895 = vrcp.pop %v886
        %v896 = vmul.f32 1.0, %v895
        %v897 = vrcp.pop %v887
        %v898 = vmul.f32 1.0, %v897
        %v899 = vrcp.pop %v888
        %v900 = vmul.f32 1.0, %v899
        %v901 = vrcp.pop %v889
        %v902 = vmul.f32 1.0, %v901
        %v903 = vrcp.pop %v890
        %v904 = vmul.f32 1.0, %v903
        %v905 = vrcp.pop %v891
        %v906 = vmul.f32 1.0, %v905
        %v907 = vrcp.pop %v892
        %v908 = vmul.f32 1.0, %v907
        %910 = vset.pattern.permute.xlu0 0
        %911 = vperm.xlu0 %910, %v449
        %v912 = vpop.permute.xlu0 %911
        %915 = vset.pattern.permute.xlu0 0
        %916 = vperm.xlu0 %915, %v450
        %v917 = vpop.permute.xlu0 %916
        %920 = vset.pattern.permute.xlu0 0
        %921 = vperm.xlu0 %920, %v451
        %v922 = vpop.permute.xlu0 %921
        %925 = vset.pattern.permute.xlu0 0
        %926 = vperm.xlu0 %925, %v452
        %v927 = vpop.permute.xlu0 %926
        %930 = vset.pattern.permute.xlu0 0
        %931 = vperm.xlu0 %930, %v453
        %v932 = vpop.permute.xlu0 %931
        %935 = vset.pattern.permute.xlu0 0
        %936 = vperm.xlu0 %935, %v454
        %v937 = vpop.permute.xlu0 %936
        %940 = vset.pattern.permute.xlu0 0
        %941 = vperm.xlu0 %940, %v455
        %v942 = vpop.permute.xlu0 %941
        %945 = vset.pattern.permute.xlu0 0
        %946 = vperm.xlu0 %945, %v456
        %v947 = vpop.permute.xlu0 %946
        %v949 = vmul.f32 %v894, %v912
        %v950 = vmul.f32 %v896, %v917
        %v951 = vmul.f32 %v898, %v922
        %v952 = vmul.f32 %v900, %v927
        %v953 = vmul.f32 %v902, %v932
        %v954 = vmul.f32 %v904, %v937
        %v955 = vmul.f32 %v906, %v942
        %v956 = vmul.f32 %v908, %v947
        %v957 = vmul.f32 %v949, 1.442695
        %v958 = vpow.pop %v957
        %v959 = vmul.f32 %v950, 1.442695
        %v960 = vpow.pop %v959
        %v961 = vmul.f32 %v951, 1.442695
        %v962 = vpow.pop %v961
        %v963 = vmul.f32 %v952, 1.442695
        %v964 = vpow.pop %v963
        %v965 = vmul.f32 %v953, 1.442695
        %v966 = vpow.pop %v965
        %v967 = vmul.f32 %v954, 1.442695
        %v968 = vpow.pop %v967
        %v969 = vmul.f32 %v955, 1.442695
        %v970 = vpow.pop %v969
        %v971 = vmul.f32 %v956, 1.442695
        %v972 = vpow.pop %v971
        %v973 = vsel %vm469, %v958, 0.0
        %v974 = vrot.slane %v973, 4
        %v975 = vadd.f32 %v973, %v974
        %v976 = vrot.slane %v975, 2
        %v977 = vadd.f32 %v975, %v976
        %v978 = vrot.slane %v977, 1
        %v979 = vadd.f32 %v977, %v978
        %v980 = vsel %vm469, %v960, 0.0
        %v981 = vrot.slane %v980, 4
        %v982 = vadd.f32 %v980, %v981
        %v983 = vrot.slane %v982, 2
        %v984 = vadd.f32 %v982, %v983
        %v985 = vrot.slane %v984, 1
        %v986 = vadd.f32 %v984, %v985
        %v987 = vsel %vm469, %v962, 0.0
        %v988 = vrot.slane %v987, 4
        %v989 = vadd.f32 %v987, %v988
        %v990 = vrot.slane %v989, 2
        %v991 = vadd.f32 %v989, %v990
        %v992 = vrot.slane %v991, 1
        %v993 = vadd.f32 %v991, %v992
        %v994 = vsel %vm469, %v964, 0.0
        %v995 = vrot.slane %v994, 4
        %v996 = vadd.f32 %v994, %v995
        %v997 = vrot.slane %v996, 2
        %v998 = vadd.f32 %v996, %v997
        %v999 = vrot.slane %v998, 1
        %v1000 = vadd.f32 %v998, %v999
        %v1001 = vsel %vm469, %v966, 0.0
        %v1002 = vrot.slane %v1001, 4
        %v1003 = vadd.f32 %v1001, %v1002
        %v1004 = vrot.slane %v1003, 2
        %v1005 = vadd.f32 %v1003, %v1004
        %v1006 = vrot.slane %v1005, 1
        %v1007 = vadd.f32 %v1005, %v1006
        %v1008 = vsel %vm469, %v968, 0.0
        %v1009 = vrot.slane %v1008, 4
        %v1010 = vadd.f32 %v1008, %v1009
        %v1011 = vrot.slane %v1010, 2
        %v1012 = vadd.f32 %v1010, %v1011
        %v1013 = vrot.slane %v1012, 1
        %v1014 = vadd.f32 %v1012, %v1013
        %v1015 = vsel %vm469, %v970, 0.0
        %v1016 = vrot.slane %v1015, 4
        %v1017 = vadd.f32 %v1015, %v1016
        %v1018 = vrot.slane %v1017, 2
        %v1019 = vadd.f32 %v1017, %v1018
        %v1020 = vrot.slane %v1019, 1
        %v1021 = vadd.f32 %v1019, %v1020
        %v1022 = vsel %vm469, %v972, 0.0
        %v1023 = vrot.slane %v1022, 4
        %v1024 = vadd.f32 %v1022, %v1023
        %v1025 = vrot.slane %v1024, 2
        %v1026 = vadd.f32 %v1024, %v1025
        %v1027 = vrot.slane %v1026, 1
        %v1028 = vadd.f32 %v1026, %v1027
        %v1029 = vmul.f32 %v622, %v958
        %v1030 = vmul.f32 %v623, %v960
        %v1031 = vmul.f32 %v624, %v962
        %v1032 = vmul.f32 %v625, %v964
        %v1033 = vmul.f32 %v626, %v966
        %v1034 = vmul.f32 %v627, %v968
        %v1035 = vmul.f32 %v628, %v970
        %v1036 = vmul.f32 %v629, %v972
        %v1037 = vsel %vm469, %v1029, 0.0
        %v1038 = vrot.slane %v1037, 4
        %v1039 = vadd.f32 %v1037, %v1038
        %v1040 = vrot.slane %v1039, 2
        %v1041 = vadd.f32 %v1039, %v1040
        %v1042 = vrot.slane %v1041, 1
        %v1043 = vadd.f32 %v1041, %v1042
        %v1044 = vsel %vm469, %v1030, 0.0
        %v1045 = vrot.slane %v1044, 4
        %v1046 = vadd.f32 %v1044, %v1045
        %v1047 = vrot.slane %v1046, 2
        %v1048 = vadd.f32 %v1046, %v1047
        %v1049 = vrot.slane %v1048, 1
        %v1050 = vadd.f32 %v1048, %v1049
        %v1051 = vsel %vm469, %v1031, 0.0
        %v1052 = vrot.slane %v1051, 4
        %v1053 = vadd.f32 %v1051, %v1052
        %v1054 = vrot.slane %v1053, 2
        %v1055 = vadd.f32 %v1053, %v1054
        %v1056 = vrot.slane %v1055, 1
        %v1057 = vadd.f32 %v1055, %v1056
        %v1058 = vsel %vm469, %v1032, 0.0
        %v1059 = vrot.slane %v1058, 4
        %v1060 = vadd.f32 %v1058, %v1059
        %v1061 = vrot.slane %v1060, 2
        %v1062 = vadd.f32 %v1060, %v1061
        %v1063 = vrot.slane %v1062, 1
        %v1064 = vadd.f32 %v1062, %v1063
        %v1065 = vsel %vm469, %v1033, 0.0
        %v1066 = vrot.slane %v1065, 4
        %v1067 = vadd.f32 %v1065, %v1066
        %v1068 = vrot.slane %v1067, 2
        %v1069 = vadd.f32 %v1067, %v1068
        %v1070 = vrot.slane %v1069, 1
        %v1071 = vadd.f32 %v1069, %v1070
        %v1072 = vsel %vm469, %v1034, 0.0
        %v1073 = vrot.slane %v1072, 4
        %v1074 = vadd.f32 %v1072, %v1073
        %v1075 = vrot.slane %v1074, 2
        %v1076 = vadd.f32 %v1074, %v1075
        %v1077 = vrot.slane %v1076, 1
        %v1078 = vadd.f32 %v1076, %v1077
        %v1079 = vsel %vm469, %v1035, 0.0
        %v1080 = vrot.slane %v1079, 4
        %v1081 = vadd.f32 %v1079, %v1080
        %v1082 = vrot.slane %v1081, 2
        %v1083 = vadd.f32 %v1081, %v1082
        %v1084 = vrot.slane %v1083, 1
        %v1085 = vadd.f32 %v1083, %v1084
        %v1086 = vsel %vm469, %v1036, 0.0
        %v1087 = vrot.slane %v1086, 4
        %v1088 = vadd.f32 %v1086, %v1087
        %v1089 = vrot.slane %v1088, 2
        %v1090 = vadd.f32 %v1088, %v1089
        %v1091 = vrot.slane %v1090, 1
        %v1092 = vadd.f32 %v1090, %v1091
        %v1093 = vrcp.pop %v979
        %v1094 = vrcp.pop %v986
        %v1095 = vrcp.pop %v993
        %v1096 = vrcp.pop %v1000
        %v1097 = vrcp.pop %v1007
        %v1098 = vrcp.pop %v1014
        %v1099 = vrcp.pop %v1021
        %v1100 = vrcp.pop %v1028
        %v1101 = vmul.f32 %v1043, %v1093
        %v1102 = vmul.f32 %v1050, %v1094
        %v1103 = vmul.f32 %v1057, %v1095
        %v1104 = vmul.f32 %v1064, %v1096
        %v1105 = vmul.f32 %v1071, %v1097
        %v1106 = vmul.f32 %v1078, %v1098
        %v1107 = vmul.f32 %v1085, %v1099
        %v1108 = vmul.f32 %v1092, %v1100
        %v1109 = vld [vmem:[#allocation7] sm:$0xff]
        %v1110 = vld [vmem:[#allocation7 + $0x8] sm:$0xff]
        %v1111 = vld [vmem:[#allocation7 + $0x10] sm:$0xff]
        %v1112 = vld [vmem:[#allocation7 + $0x18] sm:$0xff]
        %v1113 = vld [vmem:[#allocation7 + $0x20] sm:$0xff]
        %v1114 = vld [vmem:[#allocation7 + $0x28] sm:$0xff]
        %v1115 = vld [vmem:[#allocation7 + $0x30] sm:$0xff]
        %v1116 = vld [vmem:[#allocation7 + $0x38] sm:$0xff]
        %v1117 = vld [vmem:[#allocation7 + $0x40] sm:$0xff]
        %v1118 = vld [vmem:[#allocation7 + $0x48] sm:$0xff]
        %v1119 = vld [vmem:[#allocation7 + $0x50] sm:$0xff]
        %v1120 = vld [vmem:[#allocation7 + $0x58] sm:$0xff]
        %v1121 = vld [vmem:[#allocation8] sm:$0x7]
        %v1123 = vlaneseq
        %v1124 = vshrl.u32 %v1123, 7
        %v1125 = vsub.s32 0, %v1124
        %v1126 = vrot.slane %v1121, %v1125
        %v1127 = vlaneseq
        %v1128 = vshrl.u32 %v1127, 7
        %v1129 = vsub.s32 1, %v1128
        %v1130 = vrot.slane %v1121, %v1129
        %v1131 = vlaneseq
        %v1132 = vshrl.u32 %v1131, 7
        %v1133 = vsub.s32 2, %v1132
        %v1134 = vrot.slane %v1121, %v1133
        %vm1146 = vcmask 1041409
        %v1147 = vsel %vm1146, %v1102, %v1101
        %vm1148 = vcmask 1042434
        %v1149 = vsel %vm1148, %v1103, %v1147
        %vm1150 = vcmask 1043459
        %v1151 = vsel %vm1150, %v1104, %v1149
        %vm1152 = vcmask 1044484
        %v1153 = vsel %vm1152, %v1105, %v1151
        %vm1154 = vcmask 1045509
        %v1155 = vsel %vm1154, %v1106, %v1153
        %vm1156 = vcmask 1046534
        %v1157 = vsel %vm1156, %v1107, %v1155
        %vm1158 = vcmask 1047559
        %v1159 = vsel %vm1158, %v1108, %v1157
        %v1160 = vsel %vm469, %v1159, 0
        %1162 = vmatprep.subr.mxu0 %v1110
        %1163 = vmatpush1.msra.mxu0 %v1109
        %1164 = vmatprep.subr.mxu0 %v1113
        %1165 = vmatpush1.msra.mxu0 %v1112
        %1166 = vmatprep.subr.mxu0 %v1116
        %1167 = vmatpush1.msra.mxu0 %v1115
        %1168 = vmatprep.subr.mxu0 %v1119
        %1169 = vmatpush1.msra.mxu0 %v1118
        %1170 = vmatprep.subr.mxu0 0.0
        %1171 = vmatpush1.msra.mxu0 0.0
        %1172 = vmatprep.subr.mxu0 0.0
        %1173 = vmatpush1.msra.mxu0 0.0
        %1174 = vmatprep.subr.mxu0 0.0
        %1175 = vmatpush1.msra.mxu0 0.0
        %1176 = vmatprep.subr.mxu0 0.0
        %1177 = vmatpush1.msra.mxu0 0.0
        %1178 = vmatprep.subr.mxu0 0.0
        %1179 = vmatpush1.msra.mxu0 0.0
        %1180 = vmatprep.subr.mxu0 0.0
        %1181 = vmatpush1.msra.mxu0 0.0
        %1182 = vmatprep.subr.mxu0 0.0
        %1183 = vmatpush1.msra.mxu0 0.0
        %1184 = vmatprep.subr.mxu0 0.0
        %1185 = vmatpush1.msra.mxu0 0.0
        %1186 = vmatprep.subr.mxu0 0.0
        %1187 = vmatpush1.msra.mxu0 0.0
        %1188 = vmatprep.subr.mxu0 0.0
        %1189 = vmatpush1.msra.mxu0 0.0
        %1190 = vmatprep.subr.mxu0 0.0
        %1191 = vmatpush1.msra.mxu0 0.0
        %1192 = vmatprep.subr.mxu0 0.0
        %1193 = vmatpush1.msra.mxu0 0.0
        %1194 = vmatprep.subr.mxu0 0.0
        %1195 = vmatpush1.msra.mxu0 0.0
        %1196 = vmatprep.subr.mxu0 0.0
        %1197 = vmatpush1.msra.mxu0 0.0
        %1198 = vmatprep.subr.mxu0 0.0
        %1199 = vmatpush1.msra.mxu0 0.0
        %1200 = vmatprep.subr.mxu0 0.0
        %1201 = vmatpush1.msra.mxu0 0.0
        %1202 = vmatprep.subr.mxu0 0.0
        %1203 = vmatpush1.msra.mxu0 0.0
        %1204 = vmatprep.subr.mxu0 0.0
        %1205 = vmatpush1.msra.mxu0 0.0
        %1206 = vmatprep.subr.mxu0 0.0
        %1207 = vmatpush1.msra.mxu0 0.0
        %1208 = vmatprep.subr.mxu0 0.0
        %1209 = vmatpush1.msra.mxu0 0.0
        %1210 = vmatprep.subr.mxu0 0.0
        %1211 = vmatpush1.msra.mxu0 0.0
        %1212 = vmatprep.subr.mxu0 0.0
        %1213 = vmatpush1.msra.mxu0 0.0
        %1214 = vmatprep.subr.mxu0 0.0
        %1215 = vmatpush1.msra.mxu0 0.0
        %1216 = vmatprep.subr.mxu0 0.0
        %1217 = vmatpush1.msra.mxu0 0.0
        %1218 = vmatprep.subr.mxu0 0.0
        %1219 = vmatpush1.msra.mxu0 0.0
        %1220 = vmatprep.subr.mxu0 0.0
        %1221 = vmatpush1.msra.mxu0 0.0
        %1222 = vmatprep.subr.mxu0 0.0
        %1223 = vmatpush1.msra.mxu0 0.0
        %1224 = vmatprep.subr.mxu0 0.0
        %1225 = vmatpush1.msra.mxu0 0.0
        %1226 = vmatprep.mubr.f32.mxu0 0.0
        %1227 = vmatmul.mubr.f32.gmra.mrb[0].mxu0 %v1160
        %v1228 = vpop.f32.mrb[0].mxu0
        %v1229 = vadd.f32 %v1126, %v1228
        %v1230 = vpop.f32.mrb[0].mxu0
        %v1231 = vadd.f32 %v1130, %v1230
        %1232 = vdwg.mxu0
        %1233 = vmatprep.subr.mxu0 0.0
        %1234 = vmatpush1.msra.mxu0 %v1111
        %1235 = vmatprep.subr.mxu0 0.0
        %1236 = vmatpush1.msra.mxu0 %v1114
        %1237 = vmatprep.subr.mxu0 0.0
        %1238 = vmatpush1.msra.mxu0 %v1117
        %1239 = vmatprep.subr.mxu0 0.0
        %1240 = vmatpush1.msra.mxu0 %v1120
        %1241 = vmatprep.subr.mxu0 0.0
        %1242 = vmatpush1.msra.mxu0 0.0
        %1243 = vmatprep.subr.mxu0 0.0
        %1244 = vmatpush1.msra.mxu0 0.0
        %1245 = vmatprep.subr.mxu0 0.0
        %1246 = vmatpush1.msra.mxu0 0.0
        %1247 = vmatprep.subr.mxu0 0.0
        %1248 = vmatpush1.msra.mxu0 0.0
        %1249 = vmatprep.subr.mxu0 0.0
        %1250 = vmatpush1.msra.mxu0 0.0
        %1251 = vmatprep.subr.mxu0 0.0
        %1252 = vmatpush1.msra.mxu0 0.0
        %1253 = vmatprep.subr.mxu0 0.0
        %1254 = vmatpush1.msra.mxu0 0.0
        %1255 = vmatprep.subr.mxu0 0.0
        %1256 = vmatpush1.msra.mxu0 0.0
        %1257 = vmatprep.subr.mxu0 0.0
        %1258 = vmatpush1.msra.mxu0 0.0
        %1259 = vmatprep.subr.mxu0 0.0
        %1260 = vmatpush1.msra.mxu0 0.0
        %1261 = vmatprep.subr.mxu0 0.0
        %1262 = vmatpush1.msra.mxu0 0.0
        %1263 = vmatprep.subr.mxu0 0.0
        %1264 = vmatpush1.msra.mxu0 0.0
        %1265 = vmatprep.subr.mxu0 0.0
        %1266 = vmatpush1.msra.mxu0 0.0
        %1267 = vmatprep.subr.mxu0 0.0
        %1268 = vmatpush1.msra.mxu0 0.0
        %1269 = vmatprep.subr.mxu0 0.0
        %1270 = vmatpush1.msra.mxu0 0.0
        %1271 = vmatprep.subr.mxu0 0.0
        %1272 = vmatpush1.msra.mxu0 0.0
        %1273 = vmatprep.subr.mxu0 0.0
        %1274 = vmatpush1.msra.mxu0 0.0
        %1275 = vmatprep.subr.mxu0 0.0
        %1276 = vmatpush1.msra.mxu0 0.0
        %1277 = vmatprep.subr.mxu0 0.0
        %1278 = vmatpush1.msra.mxu0 0.0
        %1279 = vmatprep.subr.mxu0 0.0
        %1280 = vmatpush1.msra.mxu0 0.0
        %1281 = vmatprep.subr.mxu0 0.0
        %1282 = vmatpush1.msra.mxu0 0.0
        %1283 = vmatprep.subr.mxu0 0.0
        %1284 = vmatpush1.msra.mxu0 0.0
        %1285 = vmatprep.subr.mxu0 0.0
        %1286 = vmatpush1.msra.mxu0 0.0
        %1287 = vmatprep.subr.mxu0 0.0
        %1288 = vmatpush1.msra.mxu0 0.0
        %1289 = vmatprep.subr.mxu0 0.0
        %1290 = vmatpush1.msra.mxu0 0.0
        %1291 = vmatprep.subr.mxu0 0.0
        %1292 = vmatpush1.msra.mxu0 0.0
        %1293 = vmatprep.subr.mxu0 0.0
        %1294 = vmatpush1.msra.mxu0 0.0
        %1295 = vmatprep.subr.mxu0 0.0
        %1296 = vmatpush1.msra.mxu0 0.0
        %1297 = vmatprep.mubr.f32.mxu0 0.0
        %1298 = vmatmul.mubr.f32.gmra.mrb[0].mxu0 %v1160
        %v1299 = vpop.f32.mrb[0].mxu0
        %v1300 = vadd.f32 %v1134, %v1299
        %v1301 = vpop.f32.mrb[0].mxu0
        %1302 = vdwg.mxu0
        %v1303 = vadd.f32 %v542, %v1229
        %v1304 = vxor.u32 %v1303, 2147483648
        %v1305 = vmul.f32 %v1304, 1.442695
        %v1306 = vpow.pop %v1305
        %v1307 = vadd.f32 %v1306, 1.0
        %v1308 = vrcp.pop %v1307
        %v1309 = vmul.f32 1.0, %v1308
        %v1310 = vadd.f32 %v611, %v1231
        %v1311 = vxor.u32 %v1310, 2147483648
        %v1312 = vmul.f32 %v1311, 1.442695
        %v1313 = vpow.pop %v1312
        %v1314 = vadd.f32 %v1313, 1.0
        %v1315 = vrcp.pop %v1314
        %v1316 = vmul.f32 1.0, %v1315
        %v1317 = vmul.f32 %v1316, %v448
        %v1318 = vld [vmem:[#allocation10] sm:$0xff]
        %v1319 = vld [vmem:[#allocation10 + $0x8] sm:$0xff]
        %v1320 = vld [vmem:[#allocation10 + $0x10] sm:$0xff]
        %v1321 = vld [vmem:[#allocation10 + $0x18] sm:$0xff]
        %v1323 = vsel %vm469, %v1317, 0
        %1325 = vmatprep.subr.mxu0 0.0
        %1326 = vmatpush1.msra.mxu0 %v1318
        %1327 = vmatprep.subr.mxu0 0.0
        %1328 = vmatpush1.msra.mxu0 %v1319
        %1329 = vmatprep.subr.mxu0 0.0
        %1330 = vmatpush1.msra.mxu0 %v1320
        %1331 = vmatprep.subr.mxu0 0.0
        %1332 = vmatpush1.msra.mxu0 %v1321
        %1333 = vmatprep.subr.mxu0 0.0
        %1334 = vmatpush1.msra.mxu0 0.0
        %1335 = vmatprep.subr.mxu0 0.0
        %1336 = vmatpush1.msra.mxu0 0.0
        %1337 = vmatprep.subr.mxu0 0.0
        %1338 = vmatpush1.msra.mxu0 0.0
        %1339 = vmatprep.subr.mxu0 0.0
        %1340 = vmatpush1.msra.mxu0 0.0
        %1341 = vmatprep.subr.mxu0 0.0
        %1342 = vmatpush1.msra.mxu0 0.0
        %1343 = vmatprep.subr.mxu0 0.0
        %1344 = vmatpush1.msra.mxu0 0.0
        %1345 = vmatprep.subr.mxu0 0.0
        %1346 = vmatpush1.msra.mxu0 0.0
        %1347 = vmatprep.subr.mxu0 0.0
        %1348 = vmatpush1.msra.mxu0 0.0
        %1349 = vmatprep.subr.mxu0 0.0
        %1350 = vmatpush1.msra.mxu0 0.0
        %1351 = vmatprep.subr.mxu0 0.0
        %1352 = vmatpush1.msra.mxu0 0.0
        %1353 = vmatprep.subr.mxu0 0.0
        %1354 = vmatpush1.msra.mxu0 0.0
        %1355 = vmatprep.subr.mxu0 0.0
        %1356 = vmatpush1.msra.mxu0 0.0
        %1357 = vmatprep.subr.mxu0 0.0
        %1358 = vmatpush1.msra.mxu0 0.0
        %1359 = vmatprep.subr.mxu0 0.0
        %1360 = vmatpush1.msra.mxu0 0.0
        %1361 = vmatprep.subr.mxu0 0.0
        %1362 = vmatpush1.msra.mxu0 0.0
        %1363 = vmatprep.subr.mxu0 0.0
        %1364 = vmatpush1.msra.mxu0 0.0
        %1365 = vmatprep.subr.mxu0 0.0
        %1366 = vmatpush1.msra.mxu0 0.0
        %1367 = vmatprep.subr.mxu0 0.0
        %1368 = vmatpush1.msra.mxu0 0.0
        %1369 = vmatprep.subr.mxu0 0.0
        %1370 = vmatpush1.msra.mxu0 0.0
        %1371 = vmatprep.subr.mxu0 0.0
        %1372 = vmatpush1.msra.mxu0 0.0
        %1373 = vmatprep.subr.mxu0 0.0
        %1374 = vmatpush1.msra.mxu0 0.0
        %1375 = vmatprep.subr.mxu0 0.0
        %1376 = vmatpush1.msra.mxu0 0.0
        %1377 = vmatprep.subr.mxu0 0.0
        %1378 = vmatpush1.msra.mxu0 0.0
        %1379 = vmatprep.subr.mxu0 0.0
        %1380 = vmatpush1.msra.mxu0 0.0
        %1381 = vmatprep.subr.mxu0 0.0
        %1382 = vmatpush1.msra.mxu0 0.0
        %1383 = vmatprep.subr.mxu0 0.0
        %1384 = vmatpush1.msra.mxu0 0.0
        %1385 = vmatprep.subr.mxu0 0.0
        %1386 = vmatpush1.msra.mxu0 0.0
        %1387 = vmatprep.subr.mxu0 0.0
        %1388 = vmatpush1.msra.mxu0 0.0
        %1389 = vmatprep.mubr.f32.mxu0 0.0
        %1390 = vmatmul.mubr.f32.gmra.mrb[0].mxu0 %v1323
        %v1391 = vpop.f32.mrb[0].mxu0
        %v1392 = vadd.f32 %v1300, %v1391
        %v1393 = vpop.f32.mrb[0].mxu0
        %1394 = vdwg.mxu0
        %v1395 = vtanh.pop %v1392
        %v1396 = vsub.f32 1.0, %v1309
        %v1397 = vmul.f32 %v1396, %v448
        %v1398 = vmul.f32 %v1309, %v1395
        %v1399 = vadd.f32 %v1397, %v1398
        %1400 = vst.msk [vmem:[%s435] sm:$0xff] %vm469, %v1399
        %s1401 = sand.u32 %s240, 1
        %s1402 = scalar_lea.sflag [#allocation4], %s1401
        %s1403 = sand.u32 %s240, 1
        %s1404 = smul.addr %s1403, 8
        %s1405 = scalar_lea.vmem [#allocation11], %s1404
        // Predicated region
        $region77: #{ggru_cell.1} parent=55 // pred_check
          %p1406 = pneg %p250
        $region78: #{ggru_cell.1} parent=55 // pred_check_branch
          %1408 = sbr.rel (%p1406) target = $region80
        $region79: #{ggru_cell.1} parent=55 // pred_region
          %s1410 = ssub.s32 128, 128
          %1411 = vsyncadd %s1402, %s1410
          %s1412 = smul.addr %s28, 128
          %s1413 = scalar_lea.hbm %s9, %s1412
          %s1415 = sshll.u32 %s1405, 4
          %s1416 = int_to_ptr.vmem [resolvable:$true] %s1415
          %1418 = dma.vmem_to_hbm [thread:$0]  %s1416, 128, %s1413, %s1402
        $region80: #{ggru_cell.1} parent=55 // pred_fallthru
          _
      $region56: #{ggru_cell.1} parent=5 // pred_fallthru
        _
      %p1419 = scmp.le.s32.totalorder 2, %s23
      // Predicated region
      $region81: #{ggru_cell.1} parent=5 // pred_check
        %p1420 = pneg %p1419
      $region82: #{ggru_cell.1} parent=5 // pred_check_branch
        %1422 = sbr.rel (%p1420) target = $region84
      $region83: #{ggru_cell.1} parent=5 // pred_region
        %s1423 = ssub.s32 %s23, 2
        // Predicated region
        $region85: #{ggru_cell.1} parent=83 // pred_check
          %p1424 = pneg %p256
        $region86: #{ggru_cell.1} parent=83 // pred_check_branch
          %1426 = sbr.rel (%p1424) target = $region88
        $region87: #{ggru_cell.1} parent=83 // pred_region
          %s1427 = sand.u32 %s241, 1
          %s1428 = scalar_lea.sflag [#allocation4], %s1427
          %s1429 = sand.u32 %s241, 1
          %s1430 = smul.addr %s1429, 8
          %s1431 = scalar_lea.vmem [#allocation11], %s1430
          %1432 = dma.done %s1428, 128
        $region88: #{ggru_cell.1} parent=83 // pred_fallthru
          _
      $region84: #{ggru_cell.1} parent=5 // pred_fallthru
        _
    $region6: #{ggru_cell.1} parent=1 // loop_footer
      %s27 = sadd.s32 1, %s23
    $region7: #{ggru_cell.1} parent=1 // loop_footer_branch
      %22 = sbr.rel target = $region3
    $region8: #{ggru_cell.1} parent=1 // loop_exit
      _
    %1433 = vsyncpa [#allocation3], 1
    %s1434 = scalar_lea.sflag [#allocation3], 1
    %1435 = vsyncpa %s1434, 1
    %1436 = vsyncpa [#allocation6], 1
    %1437 = vsyncpa [#allocation9], 1
    %1438 = vsyncpa [#allocation4], 1
    %s1439 = scalar_lea.sflag [#allocation4], 1
    %1440 = vsyncpa %s1439, 1

</llo_original>
